<compile_context>
chip_gen: v7x
topology: tpu7x:2x2x1
jax: 0.10.0
libtpu: 0.0.40
codegen_flags: <defaults>
</compile_context>

<pallas_src>
import math

import jax
import jax.numpy as jnp
from jax.experimental import pallas as pl
from jax.experimental.pallas import tpu as pltpu

MAX_PERIOD = 10000.0


def _round_up(x, m):
    return (x + m - 1) // m * m


def _device_kind():
    try:
        return jax.devices()[0].device_kind.lower()
    except Exception:
        return ""


def _is_newgen():
    """True on chips with bf16 VPU/EUP and 256-deep MXU (v6e / v7x)."""
    kind = _device_kind()
    return ("v6" in kind) or ("v7" in kind)


def _choose_tiling(b, cap):
    """Return (TB, B_padded).

    TB is a multiple of 8 and <= cap; B_padded is a multiple of TB (so there
    are never partial tiles / masked sublane stores).  Whenever b >= 16 the
    grid has >= 2 steps so the 'parallel' axis can shard across both v7x
    TensorCores.
    """
    if b <= 8:
        tb = _round_up(max(b, 1), 8)
        return tb, tb
    if b < 16:
        return 8, _round_up(b, 8)
    tb = min(cap, _round_up(pl.cdiv(b, 2), 8))
    tb = max(tb, 8)
    return tb, _round_up(b, tb)


def _make_kernel(act_dtype):
    """Kernel factory closing over the (static) activation compute dtype."""

    def kernel(freqs_ref, t_ref, w1s_ref, w1c_ref, b1_ref,
               w2_ref, b2_ref, w3_ref, b3_ref, o_ref):
        # freqs_ref: (1, half) f32 ; t_ref: (TB, 1) f32
        # w*_ref: (in, out) bf16 (or f32); b*_ref: (1, out) f32
        t = t_ref[...]                                   # (TB, 1)
        arg = t * freqs_ref[...]                         # (TB, half) f32

        wdt = w1s_ref.dtype
        # First linear with the [sin, cos] lane-concat folded into two dots
        # (no XLU lane shuffle).  MXU accumulates in f32.
        # TODO(synk): when half % 128 == 0 (real DiT sin_dim=256), try a single
        # K=sin_dim dot on a lane-concatenated [sin, cos] to fill the 256-deep
        # MXU in one push (verify no relayout with pl.lower_as_mlir).
        h = jnp.dot(jnp.sin(arg).astype(wdt), w1s_ref[...],
                    preferred_element_type=jnp.float32)
        h = h + jnp.dot(jnp.cos(arg).astype(wdt), w1c_ref[...],
                        preferred_element_type=jnp.float32)
        h = (h + b1_ref[...]).astype(act_dtype)
        h = h * jax.nn.sigmoid(h)                        # SiLU

        h = jnp.dot(h.astype(wdt), w2_ref[...],
                    preferred_element_type=jnp.float32) + b2_ref[...]
        h = h.astype(act_dtype)
        h = h * jax.nn.sigmoid(h)                        # SiLU

        o_ref[...] = (jnp.dot(h.astype(wdt), w3_ref[...],
                              preferred_element_type=jnp.float32)
                      + b3_ref[...]).astype(o_ref.dtype)

    return kernel


def time_embedding(timesteps, w1, b1, w2, b2, w3, b3, *,
                   weight_dtype=jnp.bfloat16, out_dtype=jnp.float32):
    """timesteps: (B,); weights (in, out); biases (out,). Returns (B, output_dim)."""
    B = timesteps.shape[0]
    sin_dim, H = w1.shape
    out_dim = w3.shape[1]
    assert sin_dim % 2 == 0, "sinusoidal_dim must be even"
    assert w2.shape == (H, H) and w3.shape[0] == H
    half = sin_dim // 2

    # Lane-dense padded widths: intermediates / output occupy full 128-lane vregs.
    Hp = _round_up(H, 128)
    Op = _round_up(out_dim, 128)

    newgen = _is_newgen()
    act_dtype = jnp.bfloat16 if (newgen and
                                 jnp.dtype(weight_dtype) == jnp.dtype(jnp.bfloat16)) \
        else jnp.float32                 # v5e & older: no bf16 VPU/EUP path
    tb_cap = 512 if newgen else 256      # v6e/v7x: amortize per-step overhead

    # freqs depend only on static `half`: precompute at trace time, keep f32
    # (sinusoid-argument precision matters for large timesteps).
    exponent = -math.log(MAX_PERIOD) * jnp.arange(half, dtype=jnp.float32) / half
    freqs = jnp.exp(exponent).reshape(1, half)

    f32 = jnp.float32
    # Split W1 into sin-rows / cos-rows, zero-pad hidden/output lanes to 128,
    # ship weights in the (narrow) weight_dtype; MXU accumulates f32.
    # Zero padding is exact: padded lanes get bias 0 -> SiLU(0)=0 -> contribute 0.
    w1s = jnp.pad(w1[:half].astype(f32), ((0, 0), (0, Hp - H))).astype(weight_dtype)
    w1c = jnp.pad(w1[half:].astype(f32), ((0, 0), (0, Hp - H))).astype(weight_dtype)
    b1p = jnp.pad(b1.astype(f32), (0, Hp - H)).reshape(1, Hp)
    w2p = jnp.pad(w2.astype(f32), ((0, Hp - H), (0, Hp - H))).astype(weight_dtype)
    b2p = jnp.pad(b2.astype(f32), (0, Hp - H)).reshape(1, Hp)
    w3p = jnp.pad(w3.astype(f32), ((0, Hp - H), (0, Op - out_dim))).astype(weight_dtype)
    b3p = jnp.pad(b3.astype(f32), (0, Op - out_dim)).reshape(1, Op)

    # Batch tiling: pad B to a multiple of TB (padded timesteps are 0 -> finite).
    TB, Bp = _choose_tiling(B, tb_cap)
    t2d = timesteps.astype(jnp.float32).reshape(B, 1)
    if Bp != B:
        t2d = jnp.pad(t2d, ((0, Bp - B), (0, 0)))
    grid = (Bp // TB,)

    const = lambda i: (0, 0)   # weights / biases / freqs: VMEM-resident across grid
    batch = lambda i: (i, 0)   # timesteps / output: tiled over B

    wbytes = jnp.dtype(weight_dtype).itemsize
    obytes = jnp.dtype(out_dtype).itemsize

    const_bytes = (freqs.size * 4
                   + (w1s.size + w1c.size + w2p.size + w3p.size) * wbytes
                   + (b1p.size + b2p.size + b3p.size) * 4)
    stream_bytes = 2 * (TB * 4 + TB * Op * obytes)          # double-buffered t / out tiles
    scratch_bytes = TB * (3 * Hp + Op) * 4                  # f32 intermediates / spill headroom
    # x2 on const_bytes covers the fallback (double-buffered) path; clamp to the
    # v7x physical 64 MiB so the limit is valid on every chip generation.
    vmem_limit = int(min(64 << 20,
                         max(32 << 20,
                             2 * const_bytes + stream_bytes + scratch_bytes + (4 << 20))))

    cost = pl.CostEstimate(
        flops=2 * Bp * (sin_dim * Hp + Hp * Hp + Hp * Op) + 10 * Bp * Hp,
        transcendentals=Bp * (sin_dim + 2 * Hp),
        bytes_accessed=(t2d.size * 4 + freqs.size * 4 + Bp * Op * obytes
                        + (w1s.size + w1c.size + w2p.size + w3p.size) * wbytes
                        + (b1p.size + b2p.size + b3p.size) * 4),
    )

    kernel = _make_kernel(act_dtype)
    args = (freqs, t2d, w1s, w1c, b1p, w2p, b2p, w3p, b3p)

    def build_call(single_buffer_consts):
        if single_buffer_consts:
            # Constant blocks never change across the grid -> no need to
            # double-buffer them; halves weight/bias VMEM residency.
            cspec = lambda shape: pl.BlockSpec(shape, const,
                                               pipeline_mode=pl.Buffered(1))
        else:
            cspec = lambda shape: pl.BlockSpec(shape, const)
        return pl.pallas_call(
            kernel,
            out_shape=jax.ShapeDtypeStruct((Bp, Op), out_dtype),
            grid_spec=pltpu.PrefetchScalarGridSpec(
                num_scalar_prefetch=0,
                grid=grid,
                in_specs=[
                    cspec((1, half)),                  # freqs
                    pl.BlockSpec((TB, 1), batch),      # timesteps
                    cspec((half, Hp)),                 # W1 sin-rows
                    cspec((half, Hp)),                 # W1 cos-rows
                    cspec((1, Hp)),                    # b1
                    cspec((Hp, Hp)),                   # W2
                    cspec((1, Hp)),                    # b2
                    cspec((Hp, Op)),                   # W3
                    cspec((1, Op)),                    # b3
                ],
                out_specs=pl.BlockSpec((TB, Op), batch),
            ),
            compiler_params=pltpu.CompilerParams(
                dimension_semantics=("parallel",),
                vmem_limit_bytes=vmem_limit),
            cost_estimate=cost,
        )

    try:
        out = build_call(True)(*args)
    except Exception:
        # pipeline_mode=pl.Buffered(1) unsupported on this JAX build -> default
        # double-buffered constants (correctness identical, slightly more VMEM).
        out = build_call(False)(*args)

    if Bp != B:
        out = out[:B]
    if Op != out_dim:
        out = out[:, :out_dim]
    return out
    # TODO(synk): for real DiT throughput, fuse the downstream adaLN /
    # modulation projections (the 6*H conditioning matmul) into this same
    # pallas_call — at sampling batch sizes this kernel is pure fixed cost
    # (launch + weight DMA + MXU latency), so amortizing it over more fused
    # matmul work dominates any further in-kernel tuning.


def reference_time_embedding(timesteps, w1, b1, w2, b2, w3, b3):
    """Pure-JAX f32 reference replicating the PyTorch forward."""
    t = timesteps.astype(jnp.float32)
    sin_dim = w1.shape[0]
    half = sin_dim // 2
    exponent = -math.log(MAX_PERIOD) * jnp.arange(half, dtype=jnp.float32) / half
    freqs = jnp.exp(exponent)
    arg = t[:, None] * freqs[None, :]
    emb = jnp.concatenate([jnp.sin(arg), jnp.cos(arg)], axis=-1)
    h = emb @ w1 + b1
    h = h * jax.nn.sigmoid(h)
    h = h @ w2 + b2
    h = h * jax.nn.sigmoid(h)
    return h @ w3 + b3


if __name__ == "__main__":
    # Small, module-consistent shapes.
    sinusoidal_dim, hidden_dim, output_dim = 32, 64, 128
    batch = 4

    key = jax.random.PRNGKey(0)
    k_t, k1, k2, k3, kb1, kb2, kb3 = jax.random.split(key, 7)

    # Deterministic synthetic parameters (stored as (in, out)).
    w1 = 0.05 * jax.random.normal(k1, (sinusoidal_dim, hidden_dim), jnp.float32)
    b1 = 0.01 * jax.random.normal(kb1, (hidden_dim,), jnp.float32)
    w2 = 0.05 * jax.random.normal(k2, (hidden_dim, hidden_dim), jnp.float32)
    b2 = 0.01 * jax.random.normal(kb2, (hidden_dim,), jnp.float32)
    w3 = 0.05 * jax.random.normal(k3, (hidden_dim, output_dim), jnp.float32)
    b3 = 0.01 * jax.random.normal(kb3, (output_dim,), jnp.float32)

    # Example timesteps (one per batch element).
    timesteps = jax.random.randint(k_t, (batch,), 0, 1000).astype(jnp.float32)

    out = time_embedding(timesteps, w1, b1, w2, b2, w3, b3)
    out = jax.block_until_ready(out)

    ref = reference_time_embedding(timesteps, w1, b1, w2, b2, w3, b3)
    assert out.shape == (batch, output_dim)
    # bf16 weights + (on v6e/v7x) bf16 inter-layer activations -> loose tol.
    assert jnp.allclose(out, ref, atol=5e-3, rtol=2e-2), "mismatch vs reference"

    print("KERNEL_OK")
</pallas_src>

<mosaic_0001>
module attributes {stable_mosaic.version = 11 : i64} {
  func.func @kernel(%arg0: i32, %arg1: memref<1x16xf32, #tpu.memory_space<vmem>>, %arg2: memref<8x1xf32, #tpu.memory_space<vmem>>, %arg3: memref<16x128xbf16, #tpu.memory_space<vmem>>, %arg4: memref<16x128xbf16, #tpu.memory_space<vmem>>, %arg5: memref<1x128xf32, #tpu.memory_space<vmem>>, %arg6: memref<128x128xbf16, #tpu.memory_space<vmem>>, %arg7: memref<1x128xf32, #tpu.memory_space<vmem>>, %arg8: memref<128x128xbf16, #tpu.memory_space<vmem>>, %arg9: memref<1x128xf32, #tpu.memory_space<vmem>>, %arg10: memref<8x128xf32, #tpu.memory_space<vmem>>) attributes {dimension_semantics = [#tpu.dimension_semantics<parallel>], iteration_bounds = array<i64: 1>, scalar_prefetch = 0 : i64, scratch_operands = 0 : i64, tpu.core_type = #tpu.core_type<tc>, window_params = [{pipeline_mode = #tpu.pipeline_mode<synchronous>, transform_indices = @transform_0, window_bounds = array<i64: 1, 16>}, {transform_indices = @transform_1, window_bounds = array<i64: 8, 1>}, {pipeline_mode = #tpu.pipeline_mode<synchronous>, transform_indices = @transform_2, window_bounds = array<i64: 16, 128>}, {pipeline_mode = #tpu.pipeline_mode<synchronous>, transform_indices = @transform_3, window_bounds = array<i64: 16, 128>}, {pipeline_mode = #tpu.pipeline_mode<synchronous>, transform_indices = @transform_4, window_bounds = array<i64: 1, 128>}, {pipeline_mode = #tpu.pipeline_mode<synchronous>, transform_indices = @transform_5, window_bounds = array<i64: 128, 128>}, {pipeline_mode = #tpu.pipeline_mode<synchronous>, transform_indices = @transform_6, window_bounds = array<i64: 1, 128>}, {pipeline_mode = #tpu.pipeline_mode<synchronous>, transform_indices = @transform_7, window_bounds = array<i64: 128, 128>}, {pipeline_mode = #tpu.pipeline_mode<synchronous>, transform_indices = @transform_8, window_bounds = array<i64: 1, 128>}, {transform_indices = @transform_9, window_bounds = array<i64: 8, 128>}]} {
    %c0 = arith.constant 0 : index
    %c0_0 = arith.constant 0 : index
    %0 = vector.load %arg2[%c0, %c0_0] : memref<8x1xf32, #tpu.memory_space<vmem>>, vector<8x1xf32>
    %c0_1 = arith.constant 0 : index
    %c0_2 = arith.constant 0 : index
    %1 = vector.load %arg1[%c0_1, %c0_2] : memref<1x16xf32, #tpu.memory_space<vmem>>, vector<1x16xf32>
    %2 = vector.broadcast %0 : vector<8x1xf32> to vector<8x16xf32>
    %3 = vector.broadcast %1 : vector<1x16xf32> to vector<8x16xf32>
    %4 = arith.mulf %2, %3 : vector<8x16xf32>
    %5 = math.sin %4 : vector<8x16xf32>
    %6 = arith.truncf %5 : vector<8x16xf32> to vector<8x16xbf16>
    %c0_3 = arith.constant 0 : index
    %c0_4 = arith.constant 0 : index
    %7 = vector.load %arg3[%c0_3, %c0_4] : memref<16x128xbf16, #tpu.memory_space<vmem>>, vector<16x128xbf16>
    %cst = arith.constant dense<0.000000e+00> : vector<8x128xf32>
    %8 = tpu.matmul %6, %7, %cst {dimension_numbers = #tpu.dot_dimension_numbers<[1], [0], [0], [1], [0, 0, 1, 1], [], []>} : vector<8x16xbf16>, vector<16x128xbf16>, vector<8x128xf32> -> vector<8x128xf32>
    %9 = math.cos %4 : vector<8x16xf32>
    %10 = arith.truncf %9 : vector<8x16xf32> to vector<8x16xbf16>
    %c0_5 = arith.constant 0 : index
    %c0_6 = arith.constant 0 : index
    %11 = vector.load %arg4[%c0_5, %c0_6] : memref<16x128xbf16, #tpu.memory_space<vmem>>, vector<16x128xbf16>
    %cst_7 = arith.constant dense<0.000000e+00> : vector<8x128xf32>
    %12 = tpu.matmul %10, %11, %cst_7 {dimension_numbers = #tpu.dot_dimension_numbers<[1], [0], [0], [1], [0, 0, 1, 1], [], []>} : vector<8x16xbf16>, vector<16x128xbf16>, vector<8x128xf32> -> vector<8x128xf32>
    %13 = arith.addf %8, %12 : vector<8x128xf32>
    %c0_8 = arith.constant 0 : index
    %c0_9 = arith.constant 0 : index
    %14 = vector.load %arg5[%c0_8, %c0_9] : memref<1x128xf32, #tpu.memory_space<vmem>>, vector<1x128xf32>
    %15 = vector.broadcast %14 : vector<1x128xf32> to vector<8x128xf32>
    %16 = arith.addf %13, %15 : vector<8x128xf32>
    %17 = arith.negf %16 : vector<8x128xf32>
    %18 = math.exp %17 : vector<8x128xf32>
    %cst_10 = arith.constant 1.000000e+00 : f32
    %19 = vector.broadcast %cst_10 : f32 to vector<8x128xf32>
    %20 = arith.addf %19, %18 : vector<8x128xf32>
    %21 = arith.divf %19, %20 : vector<8x128xf32>
    %22 = arith.mulf %16, %21 : vector<8x128xf32>
    %23 = arith.truncf %22 : vector<8x128xf32> to vector<8x128xbf16>
    %c0_11 = arith.constant 0 : index
    %c0_12 = arith.constant 0 : index
    %24 = vector.load %arg6[%c0_11, %c0_12] : memref<128x128xbf16, #tpu.memory_space<vmem>>, vector<128x128xbf16>
    %cst_13 = arith.constant dense<0.000000e+00> : vector<8x128xf32>
    %25 = tpu.matmul %23, %24, %cst_13 {dimension_numbers = #tpu.dot_dimension_numbers<[1], [0], [0], [1], [0, 0, 1, 1], [], []>} : vector<8x128xbf16>, vector<128x128xbf16>, vector<8x128xf32> -> vector<8x128xf32>
    %c0_14 = arith.constant 0 : index
    %c0_15 = arith.constant 0 : index
    %26 = vector.load %arg7[%c0_14, %c0_15] : memref<1x128xf32, #tpu.memory_space<vmem>>, vector<1x128xf32>
    %27 = vector.broadcast %26 : vector<1x128xf32> to vector<8x128xf32>
    %28 = arith.addf %25, %27 : vector<8x128xf32>
    %29 = arith.negf %28 : vector<8x128xf32>
    %30 = math.exp %29 : vector<8x128xf32>
    %cst_16 = arith.constant 1.000000e+00 : f32
    %31 = vector.broadcast %cst_16 : f32 to vector<8x128xf32>
    %32 = arith.addf %31, %30 : vector<8x128xf32>
    %33 = arith.divf %31, %32 : vector<8x128xf32>
    %34 = arith.mulf %28, %33 : vector<8x128xf32>
    %35 = arith.truncf %34 : vector<8x128xf32> to vector<8x128xbf16>
    %c0_17 = arith.constant 0 : index
    %c0_18 = arith.constant 0 : index
    %36 = vector.load %arg8[%c0_17, %c0_18] : memref<128x128xbf16, #tpu.memory_space<vmem>>, vector<128x128xbf16>
    %cst_19 = arith.constant dense<0.000000e+00> : vector<8x128xf32>
    %37 = tpu.matmul %35, %36, %cst_19 {dimension_numbers = #tpu.dot_dimension_numbers<[1], [0], [0], [1], [0, 0, 1, 1], [], []>} : vector<8x128xbf16>, vector<128x128xbf16>, vector<8x128xf32> -> vector<8x128xf32>
    %c0_20 = arith.constant 0 : index
    %c0_21 = arith.constant 0 : index
    %38 = vector.load %arg9[%c0_20, %c0_21] : memref<1x128xf32, #tpu.memory_space<vmem>>, vector<1x128xf32>
    %39 = vector.broadcast %38 : vector<1x128xf32> to vector<8x128xf32>
    %40 = arith.addf %37, %39 : vector<8x128xf32>
    %c0_22 = arith.constant 0 : index
    %c0_23 = arith.constant 0 : index
    %41 = vector.load %arg10[%c0_22, %c0_23] : memref<8x128xf32, #tpu.memory_space<vmem>>, vector<8x128xf32>
    tpu.vector_store %arg10[%c0_22, %c0_23], %40 {strides = array<i32>} : memref<8x128xf32, #tpu.memory_space<vmem>>, vector<8x128xf32>,
    return
  }
  func.func @transform_0(%arg0: i32) -> (i32, i32) {
    %c0_i32 = arith.constant 0 : i32
    %c0_i32_0 = arith.constant 0 : i32
    %c0_i32_1 = arith.constant 0 : i32
    return %c0_i32, %c0_i32_0 : i32, i32
  }
  func.func @transform_1(%arg0: i32) -> (i32, i32) {
    %c0_i32 = arith.constant 0 : i32
    %c0_i32_0 = arith.constant 0 : i32
    return %arg0, %c0_i32 : i32, i32
  }
  func.func @transform_2(%arg0: i32) -> (i32, i32) {
    %c0_i32 = arith.constant 0 : i32
    %c0_i32_0 = arith.constant 0 : i32
    %c0_i32_1 = arith.constant 0 : i32
    return %c0_i32, %c0_i32_0 : i32, i32
  }
  func.func @transform_3(%arg0: i32) -> (i32, i32) {
    %c0_i32 = arith.constant 0 : i32
    %c0_i32_0 = arith.constant 0 : i32
    %c0_i32_1 = arith.constant 0 : i32
    return %c0_i32, %c0_i32_0 : i32, i32
  }
  func.func @transform_4(%arg0: i32) -> (i32, i32) {
    %c0_i32 = arith.constant 0 : i32
    %c0_i32_0 = arith.constant 0 : i32
    %c0_i32_1 = arith.constant 0 : i32
    return %c0_i32, %c0_i32_0 : i32, i32
  }
  func.func @transform_5(%arg0: i32) -> (i32, i32) {
    %c0_i32 = arith.constant 0 : i32
    %c0_i32_0 = arith.constant 0 : i32
    %c0_i32_1 = arith.constant 0 : i32
    return %c0_i32, %c0_i32_0 : i32, i32
  }
  func.func @transform_6(%arg0: i32) -> (i32, i32) {
    %c0_i32 = arith.constant 0 : i32
    %c0_i32_0 = arith.constant 0 : i32
    %c0_i32_1 = arith.constant 0 : i32
    return %c0_i32, %c0_i32_0 : i32, i32
  }
  func.func @transform_7(%arg0: i32) -> (i32, i32) {
    %c0_i32 = arith.constant 0 : i32
    %c0_i32_0 = arith.constant 0 : i32
    %c0_i32_1 = arith.constant 0 : i32
    return %c0_i32, %c0_i32_0 : i32, i32
  }
  func.func @transform_8(%arg0: i32) -> (i32, i32) {
    %c0_i32 = arith.constant 0 : i32
    %c0_i32_0 = arith.constant 0 : i32
    %c0_i32_1 = arith.constant 0 : i32
    return %c0_i32, %c0_i32_0 : i32, i32
  }
  func.func @transform_9(%arg0: i32) -> (i32, i32) {
    %c0_i32 = arith.constant 0 : i32
    %c0_i32_0 = arith.constant 0 : i32
    return %arg0, %c0_i32 : i32, i32
  }
}

module attributes {stable_mosaic.version = 11 : i64} {
  func.func @kernel(%arg0: i32, %arg1: memref<1x16xf32, #tpu.memory_space<vmem>>, %arg2: memref<8x1xf32, #tpu.memory_space<vmem>>, %arg3: memref<16x128xbf16, #tpu.memory_space<vmem>>, %arg4: memref<16x128xbf16, #tpu.memory_space<vmem>>, %arg5: memref<1x128xf32, #tpu.memory_space<vmem>>, %arg6: memref<128x128xbf16, #tpu.memory_space<vmem>>, %arg7: memref<1x128xf32, #tpu.memory_space<vmem>>, %arg8: memref<128x128xbf16, #tpu.memory_space<vmem>>, %arg9: memref<1x128xf32, #tpu.memory_space<vmem>>, %arg10: memref<8x128xf32, #tpu.memory_space<vmem>>) attributes {dimension_semantics = [#tpu.dimension_semantics<parallel>], iteration_bounds = array<i64: 1>, scalar_prefetch = 0 : i64, scratch_operands = 0 : i64, tpu.core_type = #tpu.core_type<tc>, window_params = [{pipeline_mode = #tpu.pipeline_mode<synchronous>, transform_indices = @transform_0, window_bounds = array<i64: 1, 16>}, {transform_indices = @transform_1, window_bounds = array<i64: 8, 1>}, {pipeline_mode = #tpu.pipeline_mode<synchronous>, transform_indices = @transform_2, window_bounds = array<i64: 16, 128>}, {pipeline_mode = #tpu.pipeline_mode<synchronous>, transform_indices = @transform_3, window_bounds = array<i64: 16, 128>}, {pipeline_mode = #tpu.pipeline_mode<synchronous>, transform_indices = @transform_4, window_bounds = array<i64: 1, 128>}, {pipeline_mode = #tpu.pipeline_mode<synchronous>, transform_indices = @transform_5, window_bounds = array<i64: 128, 128>}, {pipeline_mode = #tpu.pipeline_mode<synchronous>, transform_indices = @transform_6, window_bounds = array<i64: 1, 128>}, {pipeline_mode = #tpu.pipeline_mode<synchronous>, transform_indices = @transform_7, window_bounds = array<i64: 128, 128>}, {pipeline_mode = #tpu.pipeline_mode<synchronous>, transform_indices = @transform_8, window_bounds = array<i64: 1, 128>}, {transform_indices = @transform_9, window_bounds = array<i64: 8, 128>}]} {
    %c0 = arith.constant 0 : index
    %c0_0 = arith.constant 0 : index
    %0 = vector.load %arg2[%c0, %c0_0] : memref<8x1xf32, #tpu.memory_space<vmem>>, vector<8x1xf32>
    %c0_1 = arith.constant 0 : index
    %c0_2 = arith.constant 0 : index
    %1 = vector.load %arg1[%c0_1, %c0_2] : memref<1x16xf32, #tpu.memory_space<vmem>>, vector<1x16xf32>
    %2 = vector.broadcast %0 : vector<8x1xf32> to vector<8x16xf32>
    %3 = vector.broadcast %1 : vector<1x16xf32> to vector<8x16xf32>
    %4 = arith.mulf %2, %3 : vector<8x16xf32>
    %5 = math.sin %4 : vector<8x16xf32>
    %6 = arith.truncf %5 : vector<8x16xf32> to vector<8x16xbf16>
    %c0_3 = arith.constant 0 : index
    %c0_4 = arith.constant 0 : index
    %7 = vector.load %arg3[%c0_3, %c0_4] : memref<16x128xbf16, #tpu.memory_space<vmem>>, vector<16x128xbf16>
    %cst = arith.constant dense<0.000000e+00> : vector<8x128xf32>
    %8 = tpu.matmul %6, %7, %cst {dimension_numbers = #tpu.dot_dimension_numbers<[1], [0], [0], [1], [0, 0, 1, 1], [], []>} : vector<8x16xbf16>, vector<16x128xbf16>, vector<8x128xf32> -> vector<8x128xf32>
    %9 = math.cos %4 : vector<8x16xf32>
    %10 = arith.truncf %9 : vector<8x16xf32> to vector<8x16xbf16>
    %c0_5 = arith.constant 0 : index
    %c0_6 = arith.constant 0 : index
    %11 = vector.load %arg4[%c0_5, %c0_6] : memref<16x128xbf16, #tpu.memory_space<vmem>>, vector<16x128xbf16>
    %cst_7 = arith.constant dense<0.000000e+00> : vector<8x128xf32>
    %12 = tpu.matmul %10, %11, %cst_7 {dimension_numbers = #tpu.dot_dimension_numbers<[1], [0], [0], [1], [0, 0, 1, 1], [], []>} : vector<8x16xbf16>, vector<16x128xbf16>, vector<8x128xf32> -> vector<8x128xf32>
    %13 = arith.addf %8, %12 : vector<8x128xf32>
    %c0_8 = arith.constant 0 : index
    %c0_9 = arith.constant 0 : index
    %14 = vector.load %arg5[%c0_8, %c0_9] : memref<1x128xf32, #tpu.memory_space<vmem>>, vector<1x128xf32>
    %15 = vector.broadcast %14 : vector<1x128xf32> to vector<8x128xf32>
    %16 = arith.addf %13, %15 : vector<8x128xf32>
    %17 = arith.negf %16 : vector<8x128xf32>
    %18 = math.exp %17 : vector<8x128xf32>
    %cst_10 = arith.constant 1.000000e+00 : f32
    %19 = vector.broadcast %cst_10 : f32 to vector<8x128xf32>
    %20 = arith.addf %19, %18 : vector<8x128xf32>
    %21 = arith.divf %19, %20 : vector<8x128xf32>
    %22 = arith.mulf %16, %21 : vector<8x128xf32>
    %23 = arith.truncf %22 : vector<8x128xf32> to vector<8x128xbf16>
    %c0_11 = arith.constant 0 : index
    %c0_12 = arith.constant 0 : index
    %24 = vector.load %arg6[%c0_11, %c0_12] : memref<128x128xbf16, #tpu.memory_space<vmem>>, vector<128x128xbf16>
    %cst_13 = arith.constant dense<0.000000e+00> : vector<8x128xf32>
    %25 = tpu.matmul %23, %24, %cst_13 {dimension_numbers = #tpu.dot_dimension_numbers<[1], [0], [0], [1], [0, 0, 1, 1], [], []>} : vector<8x128xbf16>, vector<128x128xbf16>, vector<8x128xf32> -> vector<8x128xf32>
    %c0_14 = arith.constant 0 : index
    %c0_15 = arith.constant 0 : index
    %26 = vector.load %arg7[%c0_14, %c0_15] : memref<1x128xf32, #tpu.memory_space<vmem>>, vector<1x128xf32>
    %27 = vector.broadcast %26 : vector<1x128xf32> to vector<8x128xf32>
    %28 = arith.addf %25, %27 : vector<8x128xf32>
    %29 = arith.negf %28 : vector<8x128xf32>
    %30 = math.exp %29 : vector<8x128xf32>
    %cst_16 = arith.constant 1.000000e+00 : f32
    %31 = vector.broadcast %cst_16 : f32 to vector<8x128xf32>
    %32 = arith.addf %31, %30 : vector<8x128xf32>
    %33 = arith.divf %31, %32 : vector<8x128xf32>
    %34 = arith.mulf %28, %33 : vector<8x128xf32>
    %35 = arith.truncf %34 : vector<8x128xf32> to vector<8x128xbf16>
    %c0_17 = arith.constant 0 : index
    %c0_18 = arith.constant 0 : index
    %36 = vector.load %arg8[%c0_17, %c0_18] : memref<128x128xbf16, #tpu.memory_space<vmem>>, vector<128x128xbf16>
    %cst_19 = arith.constant dense<0.000000e+00> : vector<8x128xf32>
    %37 = tpu.matmul %35, %36, %cst_19 {dimension_numbers = #tpu.dot_dimension_numbers<[1], [0], [0], [1], [0, 0, 1, 1], [], []>} : vector<8x128xbf16>, vector<128x128xbf16>, vector<8x128xf32> -> vector<8x128xf32>
    %c0_20 = arith.constant 0 : index
    %c0_21 = arith.constant 0 : index
    %38 = vector.load %arg9[%c0_20, %c0_21] : memref<1x128xf32, #tpu.memory_space<vmem>>, vector<1x128xf32>
    %39 = vector.broadcast %38 : vector<1x128xf32> to vector<8x128xf32>
    %40 = arith.addf %37, %39 : vector<8x128xf32>
    %c0_22 = arith.constant 0 : index
    %c0_23 = arith.constant 0 : index
    %41 = vector.load %arg10[%c0_22, %c0_23] : memref<8x128xf32, #tpu.memory_space<vmem>>, vector<8x128xf32>
    tpu.vector_store %arg10[%c0_22, %c0_23], %40 {strides = array<i32>} : memref<8x128xf32, #tpu.memory_space<vmem>>, vector<8x128xf32>,
    return
  }
  func.func @transform_0(%arg0: i32) -> (i32, i32) {
    %c0_i32 = arith.constant 0 : i32
    %c0_i32_0 = arith.constant 0 : i32
    %c0_i32_1 = arith.constant 0 : i32
    return %c0_i32, %c0_i32_0 : i32, i32
  }
  func.func @transform_1(%arg0: i32) -> (i32, i32) {
    %c0_i32 = arith.constant 0 : i32
    %c0_i32_0 = arith.constant 0 : i32
    return %arg0, %c0_i32 : i32, i32
  }
  func.func @transform_2(%arg0: i32) -> (i32, i32) {
    %c0_i32 = arith.constant 0 : i32
    %c0_i32_0 = arith.constant 0 : i32
    %c0_i32_1 = arith.constant 0 : i32
    return %c0_i32, %c0_i32_0 : i32, i32
  }
  func.func @transform_3(%arg0: i32) -> (i32, i32) {
    %c0_i32 = arith.constant 0 : i32
    %c0_i32_0 = arith.constant 0 : i32
    %c0_i32_1 = arith.constant 0 : i32
    return %c0_i32, %c0_i32_0 : i32, i32
  }
  func.func @transform_4(%arg0: i32) -> (i32, i32) {
    %c0_i32 = arith.constant 0 : i32
    %c0_i32_0 = arith.constant 0 : i32
    %c0_i32_1 = arith.constant 0 : i32
    return %c0_i32, %c0_i32_0 : i32, i32
  }
  func.func @transform_5(%arg0: i32) -> (i32, i32) {
    %c0_i32 = arith.constant 0 : i32
    %c0_i32_0 = arith.constant 0 : i32
    %c0_i32_1 = arith.constant 0 : i32
    return %c0_i32, %c0_i32_0 : i32, i32
  }
  func.func @transform_6(%arg0: i32) -> (i32, i32) {
    %c0_i32 = arith.constant 0 : i32
    %c0_i32_0 = arith.constant 0 : i32
    %c0_i32_1 = arith.constant 0 : i32
    return %c0_i32, %c0_i32_0 : i32, i32
  }
  func.func @transform_7(%arg0: i32) -> (i32, i32) {
    %c0_i32 = arith.constant 0 : i32
    %c0_i32_0 = arith.constant 0 : i32
    %c0_i32_1 = arith.constant 0 : i32
    return %c0_i32, %c0_i32_0 : i32, i32
  }
  func.func @transform_8(%arg0: i32) -> (i32, i32) {
    %c0_i32 = arith.constant 0 : i32
    %c0_i32_0 = arith.constant 0 : i32
    %c0_i32_1 = arith.constant 0 : i32
    return %c0_i32, %c0_i32_0 : i32, i32
  }
  func.func @transform_9(%arg0: i32) -> (i32, i32) {
    %c0_i32 = arith.constant 0 : i32
    %c0_i32_0 = arith.constant 0 : i32
    return %arg0, %c0_i32 : i32, i32
  }
}

</mosaic_0001>

<llo_original>
// kernel: tpu_custom_call.1
$region0: #{tpu_custom_call.1}
  #allocation0 [shape = 'u32[]', space=smem, size = 0x4, offset = 0x4, fixed_abs, tag = 'smem constant byte address 0x4 - core index']
  #allocation1 [shape = 'u32[144,128]{1,0:T(1,128)}', space=vmem, size = 0x12000, scoped, tag = 'internal scratch']
  %s0 = inlined_call_operand.hbm [shape: f32[1,16], index: 0, kind: input, shape index: {}]
  %s1 = inlined_call_operand.vmem [shape: f32[8,1], index: 1, kind: input, shape index: {}]
  %s2 = inlined_call_operand.vmem [shape: bf16[16,128], index: 2, kind: input, shape index: {}]
  %s3 = inlined_call_operand.vmem [shape: bf16[16,128], index: 3, kind: input, shape index: {}]
  %s4 = inlined_call_operand.vmem [shape: f32[1,128], index: 4, kind: input, shape index: {}]
  %s5 = inlined_call_operand.hbm [shape: bf16[128,128], index: 5, kind: input, shape index: {}]
  %s6 = inlined_call_operand.vmem [shape: f32[1,128], index: 6, kind: input, shape index: {}]
  %s7 = inlined_call_operand.hbm [shape: bf16[128,128], index: 7, kind: input, shape index: {}]
  %s8 = inlined_call_operand.vmem [shape: f32[1,128], index: 8, kind: input, shape index: {}]
  %s9 = inlined_call_operand.hbm [shape: f32[8,128], index: 9, kind: output, shape index: {}]
  %s10 = sld [smem:[#allocation0]]
  $region58: #{tpu_custom_call.1} parent=0
    _
  %s12 = ssub.s32 1, %s10
  %s13 = scalar_select 0, %s12, %s10
  $region1: #{tpu_custom_call.1} parent=0
    #allocation2 [shape = 'u8[512]{0}', space=vmem, size = 0x400, scoped, tag = 'input window, operand 0, single buffered']
    #allocation3 [shape = 's32[1]{0}', space=sflag, size = 0x4, scoped, tag = 'scoped memory for tpu_custom_call.1']
    #allocation4 [shape = 's32[1]{0}', space=sflag, size = 0x4, scoped, tag = 'scoped memory for tpu_custom_call.1']
    #allocation5 [shape = 'u8[32768]{0}', space=vmem, size = 0x8000, scoped, tag = 'input window, operand 5, single buffered']
    #allocation6 [shape = 's32[1]{0}', space=sflag, size = 0x4, scoped, tag = 'scoped memory for tpu_custom_call.1']
    #allocation7 [shape = 'u8[32768]{0}', space=vmem, size = 0x8000, scoped, tag = 'input window, operand 7, single buffered']
    #allocation8 [shape = 'u8[4096]{0}', space=vmem, size = 0x1000, scoped, tag = 'output window, operand 0, single buffered']
    %14 = vsyncpa [#allocation3], 0
    %15 = vsyncpa [#allocation6], 0
    %16 = vsyncpa [#allocation4], 0
    // Predicated region
    $region2: #{tpu_custom_call.1} parent=1 // pred_check
      _
    $region3: #{tpu_custom_call.1} parent=1 // pred_check_branch
      %18 = sbr.rel (0) target = $region5
    $region4: #{tpu_custom_call.1} parent=1 // pred_region
      %s20 = ssub.s32 16, 16
      %21 = vsyncadd [#allocation3], %s20
      %s23 = sshll.u32 [#allocation2], 4
      %s24 = int_to_ptr.vmem [resolvable:$true] %s23
      %26 = dma.hbm_to_vmem [thread:$0]  %s0, 16, %s24, [#allocation3]
    $region5: #{tpu_custom_call.1} parent=1 // pred_fallthru
      _
    // Predicated region
    $region6: #{tpu_custom_call.1} parent=1 // pred_check
      _
    $region7: #{tpu_custom_call.1} parent=1 // pred_check_branch
      %28 = sbr.rel (0) target = $region9
    $region8: #{tpu_custom_call.1} parent=1 // pred_region
      _
    $region9: #{tpu_custom_call.1} parent=1 // pred_fallthru
      _
    // Predicated region
    $region10: #{tpu_custom_call.1} parent=1 // pred_check
      _
    $region11: #{tpu_custom_call.1} parent=1 // pred_check_branch
      %30 = sbr.rel (0) target = $region13
    $region12: #{tpu_custom_call.1} parent=1 // pred_region
      _
    $region13: #{tpu_custom_call.1} parent=1 // pred_fallthru
      _
    // Predicated region
    $region14: #{tpu_custom_call.1} parent=1 // pred_check
      _
    $region15: #{tpu_custom_call.1} parent=1 // pred_check_branch
      %32 = sbr.rel (0) target = $region17
    $region16: #{tpu_custom_call.1} parent=1 // pred_region
      _
    $region17: #{tpu_custom_call.1} parent=1 // pred_fallthru
      _
    // Predicated region
    $region18: #{tpu_custom_call.1} parent=1 // pred_check
      _
    $region19: #{tpu_custom_call.1} parent=1 // pred_check_branch
      %34 = sbr.rel (0) target = $region21
    $region20: #{tpu_custom_call.1} parent=1 // pred_region
      _
    $region21: #{tpu_custom_call.1} parent=1 // pred_fallthru
      _
    // Predicated region
    $region22: #{tpu_custom_call.1} parent=1 // pred_check
      _
    $region23: #{tpu_custom_call.1} parent=1 // pred_check_branch
      %36 = sbr.rel (0) target = $region25
    $region24: #{tpu_custom_call.1} parent=1 // pred_region
      %s38 = ssub.s32 1024, 1024
      %39 = vsyncadd [#allocation6], %s38
      %s40 = sshll.u32 [#allocation5], 4
      %s41 = int_to_ptr.vmem [resolvable:$true] %s40
      %46 = dma.hbm_to_vmem [thread:$0]  %s5, 1024, %s41, [#allocation6], 64, 64, 4
    $region25: #{tpu_custom_call.1} parent=1 // pred_fallthru
      _
    // Predicated region
    $region26: #{tpu_custom_call.1} parent=1 // pred_check
      _
    $region27: #{tpu_custom_call.1} parent=1 // pred_check_branch
      %48 = sbr.rel (0) target = $region29
    $region28: #{tpu_custom_call.1} parent=1 // pred_region
      _
    $region29: #{tpu_custom_call.1} parent=1 // pred_fallthru
      _
    // Predicated region
    $region30: #{tpu_custom_call.1} parent=1 // pred_check
      _
    $region31: #{tpu_custom_call.1} parent=1 // pred_check_branch
      %50 = sbr.rel (0) target = $region33
    $region32: #{tpu_custom_call.1} parent=1 // pred_region
      %s52 = ssub.s32 1024, 1024
      %53 = vsyncadd [#allocation6], %s52
      %s54 = sshll.u32 [#allocation7], 4
      %s55 = int_to_ptr.vmem [resolvable:$true] %s54
      %60 = dma.hbm_to_vmem [thread:$0]  %s7, 1024, %s55, [#allocation6], 64, 64, 4
    $region33: #{tpu_custom_call.1} parent=1 // pred_fallthru
      _
    // Predicated region
    $region34: #{tpu_custom_call.1} parent=1 // pred_check
      _
    $region35: #{tpu_custom_call.1} parent=1 // pred_check_branch
      %62 = sbr.rel (0) target = $region37
    $region36: #{tpu_custom_call.1} parent=1 // pred_region
      _
    $region37: #{tpu_custom_call.1} parent=1 // pred_fallthru
      _
    // Predicated region
    $region38: #{tpu_custom_call.1} parent=1 // pred_check
      _
    $region39: #{tpu_custom_call.1} parent=1 // pred_check_branch
      %64 = sbr.rel (0) target = $region41
    $region40: #{tpu_custom_call.1} parent=1 // pred_region
      %65 = dma.done [#allocation3], 16
    $region41: #{tpu_custom_call.1} parent=1 // pred_fallthru
      _
    // Predicated region
    $region42: #{tpu_custom_call.1} parent=1 // pred_check
      _
    $region43: #{tpu_custom_call.1} parent=1 // pred_check_branch
      %67 = sbr.rel (0) target = $region45
    $region44: #{tpu_custom_call.1} parent=1 // pred_region
      %68 = dma.done [#allocation6], 1024
    $region45: #{tpu_custom_call.1} parent=1 // pred_fallthru
      _
    // Predicated region
    $region46: #{tpu_custom_call.1} parent=1 // pred_check
      _
    $region47: #{tpu_custom_call.1} parent=1 // pred_check_branch
      %70 = sbr.rel (0) target = $region49
    $region48: #{tpu_custom_call.1} parent=1 // pred_region
      %71 = dma.done [#allocation6], 1024
    $region49: #{tpu_custom_call.1} parent=1 // pred_fallthru
      _
    %v73 = vld [vmem:[%s1] sm:$0xff]
    %v74 = vld [vmem:[#allocation2] sm:$0x1]
    %76 = vset.pattern.permute.xlu0 0
    %77 = vperm.xlu0 %76, %v73
    %v78 = vpop.permute.xlu0 %77
    %v81 = vlaneseq
    %v82 = vshrl.u32 %v81, 7
    %v83 = vsub.s32 0, %v82
    %v84 = vrot.slane %v74, %v83
    %v86 = vmul.f32 %v78, %v84
    %v87 = vand.u32 2147483647, %v86
    %vm88 = vcmp.le.f32.partialorder %v87, 0.7853982
    %vm89 = vcmp.lt.s32.totalorder %v86, 0
    %v90 = vand.u32 %v86, 2139095040
    %v91 = vshrl.u32 %v90, 23
    %v92 = vsub.s32 %v91, 127
    %v93 = vand.u32 2147483647, %v86
    %v94 = vand.u32 %v93, 8388607
    %v95 = vor.u32 %v94, 8388608
    %v96 = vsub.s32 0, %v95
    %v97 = vadd.s32 %v92, 1
    %vm98 = vcmp.gt.s32.totalorder %v97, 0
    %v99 = vsel %vm98, %v97, 0
    %v100 = vshrl.u32 %v99, 5
    %v101 = vand.u32 %v99, 31
    %v102 = vsub.s32 32, %v101
    %v103 = vshrl.u32 683565275, %v102
    %v104 = vshll.u32 683565275, %v101
    %v105 = vshrl.u32 2475754826, %v102
    %v106 = vor.u32 %v104, %v105
    %v107 = vshll.u32 2475754826, %v101
    %v108 = vshrl.u32 2131351028, %v102
    %v109 = vor.u32 %v107, %v108
    %v110 = vshll.u32 2131351028, %v101
    %v111 = vshrl.u32 2102212464, %v102
    %v112 = vor.u32 %v110, %v111
    %v113 = vshll.u32 2102212464, %v101
    %v114 = vshrl.u32 920167782, %v102
    %v115 = vor.u32 %v113, %v114
    %v116 = vshll.u32 920167782, %v101
    %v117 = vshrl.u32 1326507024, %v102
    %v118 = vor.u32 %v116, %v117
    %vm119 = vcmp.lt.s32.totalorder %v100, 1
    %vm120 = vcmp.lt.s32.totalorder %v100, 2
    %vm121 = vcmp.lt.s32.totalorder %v100, 3
    %vm122 = vcmp.lt.s32.totalorder %v100, 4
    %v123 = vsel %vm119, %v103, %v106
    %v124 = vsel %vm122, %v112, 2102212464
    %v125 = vsel %vm121, %v109, %v124
    %v126 = vsel %vm120, %v123, %v125
    %v127 = vsel %vm119, %v106, %v109
    %v128 = vsel %vm122, %v115, 920167782
    %v129 = vsel %vm121, %v112, %v128
    %v130 = vsel %vm120, %v127, %v129
    %v131 = vsel %vm119, %v109, %v112
    %v132 = vsel %vm122, %v118, 1326507024
    %v133 = vsel %vm121, %v115, %v132
    %v134 = vsel %vm120, %v131, %v133
    %v135 = vshll.u32 %v95, 8
    %v136 = vmul.u32.u64.compose %v135, %v134
    %v137 = vextract.low.u32 %v136
    %v138 = vextract.high.u32 %v136
    %v139 = vmul.u32.u64.compose %v135, %v130
    %v140 = vextract.low.u32 %v139
    %v141 = vextract.high.u32 %v139
    %v142 = vmul.u32 %v135, %v126
    %v143 = vadd.s32 %v138, %v140
    %vm144 = vc.u32 %v138, %v140
    %v145 = vadd.s32 %v141, 1
    %v146 = vsel %vm144, %v145, %v141
    %v147 = vadd.s32 %v142, %v146
    %v148 = vadd.s32 %v147, 536870912
    %v149 = vshrl.u32 %v148, 30
    %v150 = vshll.u32 %v149, 30
    %v151 = vsub.s32 %v147, %v150
    %vm152 = vcmp.lt.s32.totalorder %v151, 0
    %v153 = vsub.s32 0, %v151
    %v154 = vsel %vm152, %v153, %v151
    %v155 = vclz %v154
    %v156 = vsub.s32 %v155, 2
    %vm157 = vcmp.gt.s32.totalorder 0, %v156
    %v158 = vsel %vm157, 0, %v156
    %v159 = vsub.s32 32, %v158
    %v160 = vshll.u32 %v151, %v158
    %v161 = vshrl.u32 %v143, %v159
    %v162 = vor.u32 %v160, %v161
    %v163 = vsub.s32 4294967266, %v158
    %v164 = vadd.s32 %v163, 127
    %v165 = vshll.u32 %v164, 23
    %v166 = vor.u32 4788187, %v165
    %v167 = vand.u32 2147483647, %v166
    %v169 = vcvt.s32.f32 %v162
    %v170 = vmul.f32 %v169, %v167
    %v171 = vxor.u32 %v170, 2147483648
    %v172 = vsel %vm89, %v171, %v170
    %v173 = vsub.s32 4, %v149
    %v174 = vsel %vm89, %v173, %v149
    %v175 = vsel %vm88, %v86, %v172
    %v176 = vsel %vm88, 0, %v174
    %v177 = vcosq.f32.pop %v175
    %v178 = vsinq.f32.pop %v175
    %vm179 = vweird.f32 %v86
    %v180 = vadd.s32 %v176, 3
    %v181 = vand.u32 %v180, 3
    %vm182 = vcmp.lt.s32.totalorder %v181, 2
    %vm183 = vcmp.eq.s32.totalorder %v181, 0
    %v184 = vxor.u32 %v178, 2147483648
    %v185 = vsel %vm183, %v177, %v184
    %vm186 = vcmp.eq.s32.totalorder %v181, 2
    %v187 = vxor.u32 %v177, 2147483648
    %v188 = vsel %vm186, %v187, %v178
    %v189 = vsel %vm182, %v185, %v188
    %v190 = vsel %vm179, nan, %v189
    %v191 = vpack.c.bf16 %v190, %v190
    %v192 = vld [vmem:[%s2] sm:$0xf]
    %v193 = vld [vmem:[%s2 + $0x4] sm:$0xf]
    %v194 = vand.u32 2147483647, %v86
    %vm195 = vcmp.le.f32.partialorder %v194, 0.7853982
    %vm196 = vcmp.lt.s32.totalorder %v86, 0
    %v197 = vand.u32 %v86, 2139095040
    %v198 = vshrl.u32 %v197, 23
    %v199 = vsub.s32 %v198, 127
    %v200 = vand.u32 2147483647, %v86
    %v201 = vand.u32 %v200, 8388607
    %v202 = vor.u32 %v201, 8388608
    %v203 = vsub.s32 0, %v202
    %v204 = vadd.s32 %v199, 1
    %vm205 = vcmp.gt.s32.totalorder %v204, 0
    %v206 = vsel %vm205, %v204, 0
    %v207 = vshrl.u32 %v206, 5
    %v208 = vand.u32 %v206, 31
    %v209 = vsub.s32 32, %v208
    %v210 = vshrl.u32 683565275, %v209
    %v211 = vshll.u32 683565275, %v208
    %v212 = vshrl.u32 2475754826, %v209
    %v213 = vor.u32 %v211, %v212
    %v214 = vshll.u32 2475754826, %v208
    %v215 = vshrl.u32 2131351028, %v209
    %v216 = vor.u32 %v214, %v215
    %v217 = vshll.u32 2131351028, %v208
    %v218 = vshrl.u32 2102212464, %v209
    %v219 = vor.u32 %v217, %v218
    %v220 = vshll.u32 2102212464, %v208
    %v221 = vshrl.u32 920167782, %v209
    %v222 = vor.u32 %v220, %v221
    %v223 = vshll.u32 920167782, %v208
    %v224 = vshrl.u32 1326507024, %v209
    %v225 = vor.u32 %v223, %v224
    %vm226 = vcmp.lt.s32.totalorder %v207, 1
    %vm227 = vcmp.lt.s32.totalorder %v207, 2
    %vm228 = vcmp.lt.s32.totalorder %v207, 3
    %vm229 = vcmp.lt.s32.totalorder %v207, 4
    %v230 = vsel %vm226, %v210, %v213
    %v231 = vsel %vm229, %v219, 2102212464
    %v232 = vsel %vm228, %v216, %v231
    %v233 = vsel %vm227, %v230, %v232
    %v234 = vsel %vm226, %v213, %v216
    %v235 = vsel %vm229, %v222, 920167782
    %v236 = vsel %vm228, %v219, %v235
    %v237 = vsel %vm227, %v234, %v236
    %v238 = vsel %vm226, %v216, %v219
    %v239 = vsel %vm229, %v225, 1326507024
    %v240 = vsel %vm228, %v222, %v239
    %v241 = vsel %vm227, %v238, %v240
    %v242 = vshll.u32 %v202, 8
    %v243 = vmul.u32.u64.compose %v242, %v241
    %v244 = vextract.low.u32 %v243
    %v245 = vextract.high.u32 %v243
    %v246 = vmul.u32.u64.compose %v242, %v237
    %v247 = vextract.low.u32 %v246
    %v248 = vextract.high.u32 %v246
    %v249 = vmul.u32 %v242, %v233
    %v250 = vadd.s32 %v245, %v247
    %vm251 = vc.u32 %v245, %v247
    %v252 = vadd.s32 %v248, 1
    %v253 = vsel %vm251, %v252, %v248
    %v254 = vadd.s32 %v249, %v253
    %v255 = vadd.s32 %v254, 536870912
    %v256 = vshrl.u32 %v255, 30
    %v257 = vshll.u32 %v256, 30
    %v258 = vsub.s32 %v254, %v257
    %vm259 = vcmp.lt.s32.totalorder %v258, 0
    %v260 = vsub.s32 0, %v258
    %v261 = vsel %vm259, %v260, %v258
    %v262 = vclz %v261
    %v263 = vsub.s32 %v262, 2
    %vm264 = vcmp.gt.s32.totalorder 0, %v263
    %v265 = vsel %vm264, 0, %v263
    %v266 = vsub.s32 32, %v265
    %v267 = vshll.u32 %v258, %v265
    %v268 = vshrl.u32 %v250, %v266
    %v269 = vor.u32 %v267, %v268
    %v270 = vsub.s32 4294967266, %v265
    %v271 = vadd.s32 %v270, 127
    %v272 = vshll.u32 %v271, 23
    %v273 = vor.u32 4788187, %v272
    %v274 = vand.u32 2147483647, %v273
    %v276 = vcvt.s32.f32 %v269
    %v277 = vmul.f32 %v276, %v274
    %v278 = vxor.u32 %v277, 2147483648
    %v279 = vsel %vm196, %v278, %v277
    %v280 = vsub.s32 4, %v256
    %v281 = vsel %vm196, %v280, %v256
    %v282 = vsel %vm195, %v86, %v279
    %v283 = vsel %vm195, 0, %v281
    %v284 = vcosq.f32.pop %v282
    %v285 = vsinq.f32.pop %v282
    %vm286 = vweird.f32 %v86
    %v287 = vand.u32 %v283, 3
    %vm288 = vcmp.lt.s32.totalorder %v287, 2
    %vm289 = vcmp.eq.s32.totalorder %v287, 0
    %v290 = vxor.u32 %v285, 2147483648
    %v291 = vsel %vm289, %v284, %v290
    %vm292 = vcmp.eq.s32.totalorder %v287, 2
    %v293 = vxor.u32 %v284, 2147483648
    %v294 = vsel %vm292, %v293, %v285
    %v295 = vsel %vm288, %v291, %v294
    %v296 = vsel %vm286, nan, %v295
    %v297 = vpack.c.bf16 %v296, %v296
    %v298 = vld [vmem:[%s3] sm:$0xf]
    %v299 = vld [vmem:[%s3 + $0x4] sm:$0xf]
    %v302 = vunpack.c.l.b16 %v298
    %v303 = vunpack.c.l.b16 %v299
    %v304 = vpack.c.b16 %v303, %v302
    %vm306 = vcmask 130048
    %v308 = vsel %vm306, %v297, 0
    %310 = vmatprep.subr.bf16.mxu0 0
    %311 = vmatpush1.bf16.msra.mxu0 %v304
    %312 = vmatprep.subr.bf16.mxu0 0
    %313 = vmatpush1.bf16.msra.mxu0 0
    %314 = vmatprep.subr.bf16.mxu0 0
    %315 = vmatpush1.bf16.msra.mxu0 0
    %316 = vmatprep.subr.bf16.mxu0 0
    %317 = vmatpush1.bf16.msra.mxu0 0
    %318 = vmatprep.subr.bf16.mxu0 0
    %319 = vmatpush1.bf16.msra.mxu0 0
    %320 = vmatprep.subr.bf16.mxu0 0
    %321 = vmatpush1.bf16.msra.mxu0 0
    %322 = vmatprep.subr.bf16.mxu0 0
    %323 = vmatpush1.bf16.msra.mxu0 0
    %324 = vmatprep.subr.bf16.mxu0 0
    %325 = vmatpush1.bf16.msra.mxu0 0
    %326 = vmatprep.subr.bf16.mxu0 0
    %327 = vmatpush1.bf16.msra.mxu0 0
    %328 = vmatprep.subr.bf16.mxu0 0
    %329 = vmatpush1.bf16.msra.mxu0 0
    %330 = vmatprep.subr.bf16.mxu0 0
    %331 = vmatpush1.bf16.msra.mxu0 0
    %332 = vmatprep.subr.bf16.mxu0 0
    %333 = vmatpush1.bf16.msra.mxu0 0
    %334 = vmatprep.subr.bf16.mxu0 0
    %335 = vmatpush1.bf16.msra.mxu0 0
    %336 = vmatprep.subr.bf16.mxu0 0
    %337 = vmatpush1.bf16.msra.mxu0 0
    %338 = vmatprep.subr.bf16.mxu0 0
    %339 = vmatpush1.bf16.msra.mxu0 0
    %340 = vmatprep.subr.bf16.mxu0 0
    %341 = vmatpush1.bf16.msra.mxu0 0
    %342 = vmatprep.mubr.bf16.mxu0 0
    %343 = vmatmul.mubr.bf16.gmra.mrb[0].mxu0 %v308
    %v344 = vpop.f32.mrb[0].mxu0
    %v345 = vadd.f32 0.0, %v344
    %v346 = vpop.f32.mrb[0].mxu0
    %v347 = vpop.f32.mrb[0].mxu0
    %v348 = vpop.f32.mrb[0].mxu0
    %349 = vdwg.mxu0
    %v352 = vunpack.c.l.b16 %v192
    %v353 = vunpack.c.l.b16 %v193
    %v354 = vpack.c.b16 %v353, %v352
    %v357 = vsel %vm306, %v191, 0
    %359 = vmatprep.subr.bf16.mxu0 0
    %360 = vmatpush1.bf16.msra.mxu0 %v354
    %361 = vmatprep.subr.bf16.mxu0 0
    %362 = vmatpush1.bf16.msra.mxu0 0
    %363 = vmatprep.subr.bf16.mxu0 0
    %364 = vmatpush1.bf16.msra.mxu0 0
    %365 = vmatprep.subr.bf16.mxu0 0
    %366 = vmatpush1.bf16.msra.mxu0 0
    %367 = vmatprep.subr.bf16.mxu0 0
    %368 = vmatpush1.bf16.msra.mxu0 0
    %369 = vmatprep.subr.bf16.mxu0 0
    %370 = vmatpush1.bf16.msra.mxu0 0
    %371 = vmatprep.subr.bf16.mxu0 0
    %372 = vmatpush1.bf16.msra.mxu0 0
    %373 = vmatprep.subr.bf16.mxu0 0
    %374 = vmatpush1.bf16.msra.mxu0 0
    %375 = vmatprep.subr.bf16.mxu0 0
    %376 = vmatpush1.bf16.msra.mxu0 0
    %377 = vmatprep.subr.bf16.mxu0 0
    %378 = vmatpush1.bf16.msra.mxu0 0
    %379 = vmatprep.subr.bf16.mxu0 0
    %380 = vmatpush1.bf16.msra.mxu0 0
    %381 = vmatprep.subr.bf16.mxu0 0
    %382 = vmatpush1.bf16.msra.mxu0 0
    %383 = vmatprep.subr.bf16.mxu0 0
    %384 = vmatpush1.bf16.msra.mxu0 0
    %385 = vmatprep.subr.bf16.mxu0 0
    %386 = vmatpush1.bf16.msra.mxu0 0
    %387 = vmatprep.subr.bf16.mxu0 0
    %388 = vmatpush1.bf16.msra.mxu0 0
    %389 = vmatprep.subr.bf16.mxu0 0
    %390 = vmatpush1.bf16.msra.mxu0 0
    %391 = vmatprep.mubr.bf16.mxu0 0
    %392 = vmatmul.mubr.bf16.gmra.mrb[0].mxu0 %v357
    %v393 = vpop.f32.mrb[0].mxu0
    %v394 = vadd.f32 %v345, %v393
    %v395 = vpop.f32.mrb[0].mxu0
    %v396 = vpop.f32.mrb[0].mxu0
    %v397 = vpop.f32.mrb[0].mxu0
    %398 = vdwg.mxu0
    %v399 = vld [vmem:[%s4] sm:$0x1]
    %v401 = vlaneseq
    %v402 = vshrl.u32 %v401, 7
    %v403 = vsub.s32 0, %v402
    %v404 = vrot.slane %v399, %v403
    %v406 = vadd.f32 %v394, %v404
    %v407 = vxor.u32 %v406, 2147483648
    %v408 = vmul.f32 %v407, 1.442695
    %v409 = vpow.pop %v408
    %v410 = vadd.f32 %v409, 1.0
    %v411 = vrcp.pop %v410
    %v412 = vmul.f32 1.0, %v411
    %v413 = vmul.f32 %v406, %v412
    %v414 = vpack.c.bf16 %v413, %v413
    %v415 = vld [vmem:[#allocation5] sm:$0xf]
    %v416 = vld [vmem:[#allocation5 + $0x4] sm:$0xf]
    %v417 = vld [vmem:[#allocation5 + $0x8] sm:$0xf]
    %v418 = vld [vmem:[#allocation5 + $0xc] sm:$0xf]
    %v419 = vld [vmem:[#allocation5 + $0x10] sm:$0xf]
    %v420 = vld [vmem:[#allocation5 + $0x14] sm:$0xf]
    %v421 = vld [vmem:[#allocation5 + $0x18] sm:$0xf]
    %v422 = vld [vmem:[#allocation5 + $0x1c] sm:$0xf]
    %v423 = vld [vmem:[#allocation5 + $0x20] sm:$0xf]
    %v424 = vld [vmem:[#allocation5 + $0x24] sm:$0xf]
    %v425 = vld [vmem:[#allocation5 + $0x28] sm:$0xf]
    %v426 = vld [vmem:[#allocation5 + $0x2c] sm:$0xf]
    %v427 = vld [vmem:[#allocation5 + $0x30] sm:$0xf]
    %v428 = vld [vmem:[#allocation5 + $0x34] sm:$0xf]
    %v429 = vld [vmem:[#allocation5 + $0x38] sm:$0xf]
    %v430 = vld [vmem:[#allocation5 + $0x3c] sm:$0xf]
    %v431 = vld [vmem:[%s6] sm:$0x1]
    %v433 = vlaneseq
    %v434 = vshrl.u32 %v433, 7
    %v435 = vsub.s32 0, %v434
    %v436 = vrot.slane %v431, %v435
    %v454 = vunpack.c.l.b16 %v415
    %v455 = vunpack.c.l.b16 %v416
    %v456 = vunpack.c.l.b16 %v417
    %v457 = vunpack.c.l.b16 %v418
    %v458 = vunpack.c.l.b16 %v419
    %v459 = vunpack.c.l.b16 %v420
    %v460 = vunpack.c.l.b16 %v421
    %v461 = vunpack.c.l.b16 %v422
    %v462 = vunpack.c.l.b16 %v423
    %v463 = vunpack.c.l.b16 %v424
    %v464 = vunpack.c.l.b16 %v425
    %v465 = vunpack.c.l.b16 %v426
    %v466 = vunpack.c.l.b16 %v427
    %v467 = vunpack.c.l.b16 %v428
    %v468 = vunpack.c.l.b16 %v429
    %v469 = vunpack.c.l.b16 %v430
    %v470 = vpack.c.b16 %v455, %v454
    %v471 = vpack.c.b16 %v457, %v456
    %v472 = vpack.c.b16 %v459, %v458
    %v473 = vpack.c.b16 %v461, %v460
    %v474 = vpack.c.b16 %v463, %v462
    %v475 = vpack.c.b16 %v465, %v464
    %v476 = vpack.c.b16 %v467, %v466
    %v477 = vpack.c.b16 %v469, %v468
    %486 = vmatprep.subr.bf16.mxu0 0
    %487 = vmatpush1.bf16.msra.mxu0 %v470
    %488 = vmatprep.subr.bf16.mxu0 0
    %489 = vmatpush1.bf16.msra.mxu0 %v471
    %490 = vmatprep.subr.bf16.mxu0 0
    %491 = vmatpush1.bf16.msra.mxu0 %v472
    %492 = vmatprep.subr.bf16.mxu0 0
    %493 = vmatpush1.bf16.msra.mxu0 %v473
    %494 = vmatprep.subr.bf16.mxu0 0
    %495 = vmatpush1.bf16.msra.mxu0 %v474
    %496 = vmatprep.subr.bf16.mxu0 0
    %497 = vmatpush1.bf16.msra.mxu0 %v475
    %498 = vmatprep.subr.bf16.mxu0 0
    %499 = vmatpush1.bf16.msra.mxu0 %v476
    %500 = vmatprep.subr.bf16.mxu0 0
    %501 = vmatpush1.bf16.msra.mxu0 %v477
    %502 = vmatprep.subr.bf16.mxu0 0
    %503 = vmatpush1.bf16.msra.mxu0 0
    %504 = vmatprep.subr.bf16.mxu0 0
    %505 = vmatpush1.bf16.msra.mxu0 0
    %506 = vmatprep.subr.bf16.mxu0 0
    %507 = vmatpush1.bf16.msra.mxu0 0
    %508 = vmatprep.subr.bf16.mxu0 0
    %509 = vmatpush1.bf16.msra.mxu0 0
    %510 = vmatprep.subr.bf16.mxu0 0
    %511 = vmatpush1.bf16.msra.mxu0 0
    %512 = vmatprep.subr.bf16.mxu0 0
    %513 = vmatpush1.bf16.msra.mxu0 0
    %514 = vmatprep.subr.bf16.mxu0 0
    %515 = vmatpush1.bf16.msra.mxu0 0
    %516 = vmatprep.subr.bf16.mxu0 0
    %517 = vmatpush1.bf16.msra.mxu0 0
    %518 = vmatprep.mubr.bf16.mxu0 0
    %519 = vmatmul.mubr.bf16.gmra.mrb[0].mxu0 %v414
    %v520 = vpop.f32.mrb[0].mxu0
    %v521 = vadd.f32 %v436, %v520
    %v522 = vpop.f32.mrb[0].mxu0
    %v523 = vpop.f32.mrb[0].mxu0
    %v524 = vpop.f32.mrb[0].mxu0
    %525 = vdwg.mxu0
    %v526 = vxor.u32 %v521, 2147483648
    %v527 = vmul.f32 %v526, 1.442695
    %v528 = vpow.pop %v527
    %v529 = vadd.f32 %v528, 1.0
    %v530 = vrcp.pop %v529
    %v531 = vmul.f32 1.0, %v530
    %v532 = vmul.f32 %v521, %v531
    %v533 = vpack.c.bf16 %v532, %v532
    %v534 = vld [vmem:[#allocation7] sm:$0xf]
    %v535 = vld [vmem:[#allocation7 + $0x4] sm:$0xf]
    %v536 = vld [vmem:[#allocation7 + $0x8] sm:$0xf]
    %v537 = vld [vmem:[#allocation7 + $0xc] sm:$0xf]
    %v538 = vld [vmem:[#allocation7 + $0x10] sm:$0xf]
    %v539 = vld [vmem:[#allocation7 + $0x14] sm:$0xf]
    %v540 = vld [vmem:[#allocation7 + $0x18] sm:$0xf]
    %v541 = vld [vmem:[#allocation7 + $0x1c] sm:$0xf]
    %v542 = vld [vmem:[#allocation7 + $0x20] sm:$0xf]
    %v543 = vld [vmem:[#allocation7 + $0x24] sm:$0xf]
    %v544 = vld [vmem:[#allocation7 + $0x28] sm:$0xf]
    %v545 = vld [vmem:[#allocation7 + $0x2c] sm:$0xf]
    %v546 = vld [vmem:[#allocation7 + $0x30] sm:$0xf]
    %v547 = vld [vmem:[#allocation7 + $0x34] sm:$0xf]
    %v548 = vld [vmem:[#allocation7 + $0x38] sm:$0xf]
    %v549 = vld [vmem:[#allocation7 + $0x3c] sm:$0xf]
    %v550 = vld [vmem:[%s8] sm:$0x1]
    %v552 = vlaneseq
    %v553 = vshrl.u32 %v552, 7
    %v554 = vsub.s32 0, %v553
    %v555 = vrot.slane %v550, %v554
    %v573 = vunpack.c.l.b16 %v534
    %v574 = vunpack.c.l.b16 %v535
    %v575 = vunpack.c.l.b16 %v536
    %v576 = vunpack.c.l.b16 %v537
    %v577 = vunpack.c.l.b16 %v538
    %v578 = vunpack.c.l.b16 %v539
    %v579 = vunpack.c.l.b16 %v540
    %v580 = vunpack.c.l.b16 %v541
    %v581 = vunpack.c.l.b16 %v542
    %v582 = vunpack.c.l.b16 %v543
    %v583 = vunpack.c.l.b16 %v544
    %v584 = vunpack.c.l.b16 %v545
    %v585 = vunpack.c.l.b16 %v546
    %v586 = vunpack.c.l.b16 %v547
    %v587 = vunpack.c.l.b16 %v548
    %v588 = vunpack.c.l.b16 %v549
    %v589 = vpack.c.b16 %v574, %v573
    %v590 = vpack.c.b16 %v576, %v575
    %v591 = vpack.c.b16 %v578, %v577
    %v592 = vpack.c.b16 %v580, %v579
    %v593 = vpack.c.b16 %v582, %v581
    %v594 = vpack.c.b16 %v584, %v583
    %v595 = vpack.c.b16 %v586, %v585
    %v596 = vpack.c.b16 %v588, %v587
    %605 = vmatprep.subr.bf16.mxu0 0
    %606 = vmatpush1.bf16.msra.mxu0 %v589
    %607 = vmatprep.subr.bf16.mxu0 0
    %608 = vmatpush1.bf16.msra.mxu0 %v590
    %609 = vmatprep.subr.bf16.mxu0 0
    %610 = vmatpush1.bf16.msra.mxu0 %v591
    %611 = vmatprep.subr.bf16.mxu0 0
    %612 = vmatpush1.bf16.msra.mxu0 %v592
    %613 = vmatprep.subr.bf16.mxu0 0
    %614 = vmatpush1.bf16.msra.mxu0 %v593
    %615 = vmatprep.subr.bf16.mxu0 0
    %616 = vmatpush1.bf16.msra.mxu0 %v594
    %617 = vmatprep.subr.bf16.mxu0 0
    %618 = vmatpush1.bf16.msra.mxu0 %v595
    %619 = vmatprep.subr.bf16.mxu0 0
    %620 = vmatpush1.bf16.msra.mxu0 %v596
    %621 = vmatprep.subr.bf16.mxu0 0
    %622 = vmatpush1.bf16.msra.mxu0 0
    %623 = vmatprep.subr.bf16.mxu0 0
    %624 = vmatpush1.bf16.msra.mxu0 0
    %625 = vmatprep.subr.bf16.mxu0 0
    %626 = vmatpush1.bf16.msra.mxu0 0
    %627 = vmatprep.subr.bf16.mxu0 0
    %628 = vmatpush1.bf16.msra.mxu0 0
    %629 = vmatprep.subr.bf16.mxu0 0
    %630 = vmatpush1.bf16.msra.mxu0 0
    %631 = vmatprep.subr.bf16.mxu0 0
    %632 = vmatpush1.bf16.msra.mxu0 0
    %633 = vmatprep.subr.bf16.mxu0 0
    %634 = vmatpush1.bf16.msra.mxu0 0
    %635 = vmatprep.subr.bf16.mxu0 0
    %636 = vmatpush1.bf16.msra.mxu0 0
    %637 = vmatprep.mubr.bf16.mxu0 0
    %638 = vmatmul.mubr.bf16.gmra.mrb[0].mxu0 %v533
    %v639 = vpop.f32.mrb[0].mxu0
    %v640 = vadd.f32 %v555, %v639
    %v641 = vpop.f32.mrb[0].mxu0
    %v642 = vpop.f32.mrb[0].mxu0
    %v643 = vpop.f32.mrb[0].mxu0
    %644 = vdwg.mxu0
    %645 = vst [vmem:[#allocation8] sm:$0xff] %v640
    // Predicated region
    $region50: #{tpu_custom_call.1} parent=1 // pred_check
      _
    $region51: #{tpu_custom_call.1} parent=1 // pred_check_branch
      %647 = sbr.rel (0) target = $region53
    $region52: #{tpu_custom_call.1} parent=1 // pred_region
      %s649 = ssub.s32 128, 128
      %650 = vsyncadd [#allocation4], %s649
      %s652 = sshll.u32 [#allocation8], 4
      %s653 = int_to_ptr.vmem [resolvable:$true] %s652
      %655 = dma.vmem_to_hbm [thread:$0]  %s653, 128, %s9, [#allocation4]
    $region53: #{tpu_custom_call.1} parent=1 // pred_fallthru
      _
    // Predicated region
    $region54: #{tpu_custom_call.1} parent=1 // pred_check
      _
    $region55: #{tpu_custom_call.1} parent=1 // pred_check_branch
      %657 = sbr.rel (0) target = $region57
    $region56: #{tpu_custom_call.1} parent=1 // pred_region
      %658 = dma.done [#allocation4], 128
    $region57: #{tpu_custom_call.1} parent=1 // pred_fallthru
      _
    %659 = vsyncpa [#allocation3], 1
    %660 = vsyncpa [#allocation6], 1
    %661 = vsyncpa [#allocation4], 1

// kernel: tpu_custom_call.1
$region0: #{tpu_custom_call.1}
  #allocation0 [shape = 'u32[]', space=smem, size = 0x4, offset = 0x4, fixed_abs, tag = 'smem constant byte address 0x4 - core index']
  #allocation1 [shape = 'u32[144,128]{1,0:T(1,128)}', space=vmem, size = 0x12000, scoped, tag = 'internal scratch']
  %s0 = inlined_call_operand.hbm [shape: f32[1,16], index: 0, kind: input, shape index: {}]
  %s1 = inlined_call_operand.vmem [shape: f32[8,1], index: 1, kind: input, shape index: {}]
  %s2 = inlined_call_operand.vmem [shape: bf16[16,128], index: 2, kind: input, shape index: {}]
  %s3 = inlined_call_operand.vmem [shape: bf16[16,128], index: 3, kind: input, shape index: {}]
  %s4 = inlined_call_operand.vmem [shape: f32[1,128], index: 4, kind: input, shape index: {}]
  %s5 = inlined_call_operand.hbm [shape: bf16[128,128], index: 5, kind: input, shape index: {}]
  %s6 = inlined_call_operand.vmem [shape: f32[1,128], index: 6, kind: input, shape index: {}]
  %s7 = inlined_call_operand.hbm [shape: bf16[128,128], index: 7, kind: input, shape index: {}]
  %s8 = inlined_call_operand.vmem [shape: f32[1,128], index: 8, kind: input, shape index: {}]
  %s9 = inlined_call_operand.hbm [shape: f32[8,128], index: 9, kind: output, shape index: {}]
  %s10 = sld [smem:[#allocation0]]
  $region58: #{tpu_custom_call.1} parent=0
    _
  %s12 = ssub.s32 1, %s10
  %s13 = scalar_select 0, %s12, %s10
  $region1: #{tpu_custom_call.1} parent=0
    #allocation2 [shape = 'u8[512]{0}', space=vmem, size = 0x400, scoped, tag = 'input window, operand 0, single buffered']
    #allocation3 [shape = 's32[1]{0}', space=sflag, size = 0x4, scoped, tag = 'scoped memory for tpu_custom_call.1']
    #allocation4 [shape = 's32[1]{0}', space=sflag, size = 0x4, scoped, tag = 'scoped memory for tpu_custom_call.1']
    #allocation5 [shape = 'u8[32768]{0}', space=vmem, size = 0x8000, scoped, tag = 'input window, operand 5, single buffered']
    #allocation6 [shape = 's32[1]{0}', space=sflag, size = 0x4, scoped, tag = 'scoped memory for tpu_custom_call.1']
    #allocation7 [shape = 'u8[32768]{0}', space=vmem, size = 0x8000, scoped, tag = 'input window, operand 7, single buffered']
    #allocation8 [shape = 'u8[4096]{0}', space=vmem, size = 0x1000, scoped, tag = 'output window, operand 0, single buffered']
    %14 = vsyncpa [#allocation3], 0
    %15 = vsyncpa [#allocation6], 0
    %16 = vsyncpa [#allocation4], 0
    // Predicated region
    $region2: #{tpu_custom_call.1} parent=1 // pred_check
      _
    $region3: #{tpu_custom_call.1} parent=1 // pred_check_branch
      %18 = sbr.rel (0) target = $region5
    $region4: #{tpu_custom_call.1} parent=1 // pred_region
      %s20 = ssub.s32 16, 16
      %21 = vsyncadd [#allocation3], %s20
      %s23 = sshll.u32 [#allocation2], 4
      %s24 = int_to_ptr.vmem [resolvable:$true] %s23
      %26 = dma.hbm_to_vmem [thread:$0]  %s0, 16, %s24, [#allocation3]
    $region5: #{tpu_custom_call.1} parent=1 // pred_fallthru
      _
    // Predicated region
    $region6: #{tpu_custom_call.1} parent=1 // pred_check
      _
    $region7: #{tpu_custom_call.1} parent=1 // pred_check_branch
      %28 = sbr.rel (0) target = $region9
    $region8: #{tpu_custom_call.1} parent=1 // pred_region
      _
    $region9: #{tpu_custom_call.1} parent=1 // pred_fallthru
      _
    // Predicated region
    $region10: #{tpu_custom_call.1} parent=1 // pred_check
      _
    $region11: #{tpu_custom_call.1} parent=1 // pred_check_branch
      %30 = sbr.rel (0) target = $region13
    $region12: #{tpu_custom_call.1} parent=1 // pred_region
      _
    $region13: #{tpu_custom_call.1} parent=1 // pred_fallthru
      _
    // Predicated region
    $region14: #{tpu_custom_call.1} parent=1 // pred_check
      _
    $region15: #{tpu_custom_call.1} parent=1 // pred_check_branch
      %32 = sbr.rel (0) target = $region17
    $region16: #{tpu_custom_call.1} parent=1 // pred_region
      _
    $region17: #{tpu_custom_call.1} parent=1 // pred_fallthru
      _
    // Predicated region
    $region18: #{tpu_custom_call.1} parent=1 // pred_check
      _
    $region19: #{tpu_custom_call.1} parent=1 // pred_check_branch
      %34 = sbr.rel (0) target = $region21
    $region20: #{tpu_custom_call.1} parent=1 // pred_region
      _
    $region21: #{tpu_custom_call.1} parent=1 // pred_fallthru
      _
    // Predicated region
    $region22: #{tpu_custom_call.1} parent=1 // pred_check
      _
    $region23: #{tpu_custom_call.1} parent=1 // pred_check_branch
      %36 = sbr.rel (0) target = $region25
    $region24: #{tpu_custom_call.1} parent=1 // pred_region
      %s38 = ssub.s32 1024, 1024
      %39 = vsyncadd [#allocation6], %s38
      %s40 = sshll.u32 [#allocation5], 4
      %s41 = int_to_ptr.vmem [resolvable:$true] %s40
      %46 = dma.hbm_to_vmem [thread:$0]  %s5, 1024, %s41, [#allocation6], 64, 64, 4
    $region25: #{tpu_custom_call.1} parent=1 // pred_fallthru
      _
    // Predicated region
    $region26: #{tpu_custom_call.1} parent=1 // pred_check
      _
    $region27: #{tpu_custom_call.1} parent=1 // pred_check_branch
      %48 = sbr.rel (0) target = $region29
    $region28: #{tpu_custom_call.1} parent=1 // pred_region
      _
    $region29: #{tpu_custom_call.1} parent=1 // pred_fallthru
      _
    // Predicated region
    $region30: #{tpu_custom_call.1} parent=1 // pred_check
      _
    $region31: #{tpu_custom_call.1} parent=1 // pred_check_branch
      %50 = sbr.rel (0) target = $region33
    $region32: #{tpu_custom_call.1} parent=1 // pred_region
      %s52 = ssub.s32 1024, 1024
      %53 = vsyncadd [#allocation6], %s52
      %s54 = sshll.u32 [#allocation7], 4
      %s55 = int_to_ptr.vmem [resolvable:$true] %s54
      %60 = dma.hbm_to_vmem [thread:$0]  %s7, 1024, %s55, [#allocation6], 64, 64, 4
    $region33: #{tpu_custom_call.1} parent=1 // pred_fallthru
      _
    // Predicated region
    $region34: #{tpu_custom_call.1} parent=1 // pred_check
      _
    $region35: #{tpu_custom_call.1} parent=1 // pred_check_branch
      %62 = sbr.rel (0) target = $region37
    $region36: #{tpu_custom_call.1} parent=1 // pred_region
      _
    $region37: #{tpu_custom_call.1} parent=1 // pred_fallthru
      _
    // Predicated region
    $region38: #{tpu_custom_call.1} parent=1 // pred_check
      _
    $region39: #{tpu_custom_call.1} parent=1 // pred_check_branch
      %64 = sbr.rel (0) target = $region41
    $region40: #{tpu_custom_call.1} parent=1 // pred_region
      %65 = dma.done [#allocation3], 16
    $region41: #{tpu_custom_call.1} parent=1 // pred_fallthru
      _
    // Predicated region
    $region42: #{tpu_custom_call.1} parent=1 // pred_check
      _
    $region43: #{tpu_custom_call.1} parent=1 // pred_check_branch
      %67 = sbr.rel (0) target = $region45
    $region44: #{tpu_custom_call.1} parent=1 // pred_region
      %68 = dma.done [#allocation6], 1024
    $region45: #{tpu_custom_call.1} parent=1 // pred_fallthru
      _
    // Predicated region
    $region46: #{tpu_custom_call.1} parent=1 // pred_check
      _
    $region47: #{tpu_custom_call.1} parent=1 // pred_check_branch
      %70 = sbr.rel (0) target = $region49
    $region48: #{tpu_custom_call.1} parent=1 // pred_region
      %71 = dma.done [#allocation6], 1024
    $region49: #{tpu_custom_call.1} parent=1 // pred_fallthru
      _
    %v73 = vld [vmem:[%s1] sm:$0xff]
    %v74 = vld [vmem:[#allocation2] sm:$0x1]
    %76 = vset.pattern.permute.xlu0 0
    %77 = vperm.xlu0 %76, %v73
    %v78 = vpop.permute.xlu0 %77
    %v81 = vlaneseq
    %v82 = vshrl.u32 %v81, 7
    %v83 = vsub.s32 0, %v82
    %v84 = vrot.slane %v74, %v83
    %v86 = vmul.f32 %v78, %v84
    %v87 = vand.u32 2147483647, %v86
    %vm88 = vcmp.le.f32.partialorder %v87, 0.7853982
    %vm89 = vcmp.lt.s32.totalorder %v86, 0
    %v90 = vand.u32 %v86, 2139095040
    %v91 = vshrl.u32 %v90, 23
    %v92 = vsub.s32 %v91, 127
    %v93 = vand.u32 2147483647, %v86
    %v94 = vand.u32 %v93, 8388607
    %v95 = vor.u32 %v94, 8388608
    %v96 = vsub.s32 0, %v95
    %v97 = vadd.s32 %v92, 1
    %vm98 = vcmp.gt.s32.totalorder %v97, 0
    %v99 = vsel %vm98, %v97, 0
    %v100 = vshrl.u32 %v99, 5
    %v101 = vand.u32 %v99, 31
    %v102 = vsub.s32 32, %v101
    %v103 = vshrl.u32 683565275, %v102
    %v104 = vshll.u32 683565275, %v101
    %v105 = vshrl.u32 2475754826, %v102
    %v106 = vor.u32 %v104, %v105
    %v107 = vshll.u32 2475754826, %v101
    %v108 = vshrl.u32 2131351028, %v102
    %v109 = vor.u32 %v107, %v108
    %v110 = vshll.u32 2131351028, %v101
    %v111 = vshrl.u32 2102212464, %v102
    %v112 = vor.u32 %v110, %v111
    %v113 = vshll.u32 2102212464, %v101
    %v114 = vshrl.u32 920167782, %v102
    %v115 = vor.u32 %v113, %v114
    %v116 = vshll.u32 920167782, %v101
    %v117 = vshrl.u32 1326507024, %v102
    %v118 = vor.u32 %v116, %v117
    %vm119 = vcmp.lt.s32.totalorder %v100, 1
    %vm120 = vcmp.lt.s32.totalorder %v100, 2
    %vm121 = vcmp.lt.s32.totalorder %v100, 3
    %vm122 = vcmp.lt.s32.totalorder %v100, 4
    %v123 = vsel %vm119, %v103, %v106
    %v124 = vsel %vm122, %v112, 2102212464
    %v125 = vsel %vm121, %v109, %v124
    %v126 = vsel %vm120, %v123, %v125
    %v127 = vsel %vm119, %v106, %v109
    %v128 = vsel %vm122, %v115, 920167782
    %v129 = vsel %vm121, %v112, %v128
    %v130 = vsel %vm120, %v127, %v129
    %v131 = vsel %vm119, %v109, %v112
    %v132 = vsel %vm122, %v118, 1326507024
    %v133 = vsel %vm121, %v115, %v132
    %v134 = vsel %vm120, %v131, %v133
    %v135 = vshll.u32 %v95, 8
    %v136 = vmul.u32.u64.compose %v135, %v134
    %v137 = vextract.low.u32 %v136
    %v138 = vextract.high.u32 %v136
    %v139 = vmul.u32.u64.compose %v135, %v130
    %v140 = vextract.low.u32 %v139
    %v141 = vextract.high.u32 %v139
    %v142 = vmul.u32 %v135, %v126
    %v143 = vadd.s32 %v138, %v140
    %vm144 = vc.u32 %v138, %v140
    %v145 = vadd.s32 %v141, 1
    %v146 = vsel %vm144, %v145, %v141
    %v147 = vadd.s32 %v142, %v146
    %v148 = vadd.s32 %v147, 536870912
    %v149 = vshrl.u32 %v148, 30
    %v150 = vshll.u32 %v149, 30
    %v151 = vsub.s32 %v147, %v150
    %vm152 = vcmp.lt.s32.totalorder %v151, 0
    %v153 = vsub.s32 0, %v151
    %v154 = vsel %vm152, %v153, %v151
    %v155 = vclz %v154
    %v156 = vsub.s32 %v155, 2
    %vm157 = vcmp.gt.s32.totalorder 0, %v156
    %v158 = vsel %vm157, 0, %v156
    %v159 = vsub.s32 32, %v158
    %v160 = vshll.u32 %v151, %v158
    %v161 = vshrl.u32 %v143, %v159
    %v162 = vor.u32 %v160, %v161
    %v163 = vsub.s32 4294967266, %v158
    %v164 = vadd.s32 %v163, 127
    %v165 = vshll.u32 %v164, 23
    %v166 = vor.u32 4788187, %v165
    %v167 = vand.u32 2147483647, %v166
    %v169 = vcvt.s32.f32 %v162
    %v170 = vmul.f32 %v169, %v167
    %v171 = vxor.u32 %v170, 2147483648
    %v172 = vsel %vm89, %v171, %v170
    %v173 = vsub.s32 4, %v149
    %v174 = vsel %vm89, %v173, %v149
    %v175 = vsel %vm88, %v86, %v172
    %v176 = vsel %vm88, 0, %v174
    %v177 = vcosq.f32.pop %v175
    %v178 = vsinq.f32.pop %v175
    %vm179 = vweird.f32 %v86
    %v180 = vadd.s32 %v176, 3
    %v181 = vand.u32 %v180, 3
    %vm182 = vcmp.lt.s32.totalorder %v181, 2
    %vm183 = vcmp.eq.s32.totalorder %v181, 0
    %v184 = vxor.u32 %v178, 2147483648
    %v185 = vsel %vm183, %v177, %v184
    %vm186 = vcmp.eq.s32.totalorder %v181, 2
    %v187 = vxor.u32 %v177, 2147483648
    %v188 = vsel %vm186, %v187, %v178
    %v189 = vsel %vm182, %v185, %v188
    %v190 = vsel %vm179, nan, %v189
    %v191 = vpack.c.bf16 %v190, %v190
    %v192 = vld [vmem:[%s2] sm:$0xf]
    %v193 = vld [vmem:[%s2 + $0x4] sm:$0xf]
    %v194 = vand.u32 2147483647, %v86
    %vm195 = vcmp.le.f32.partialorder %v194, 0.7853982
    %vm196 = vcmp.lt.s32.totalorder %v86, 0
    %v197 = vand.u32 %v86, 2139095040
    %v198 = vshrl.u32 %v197, 23
    %v199 = vsub.s32 %v198, 127
    %v200 = vand.u32 2147483647, %v86
    %v201 = vand.u32 %v200, 8388607
    %v202 = vor.u32 %v201, 8388608
    %v203 = vsub.s32 0, %v202
    %v204 = vadd.s32 %v199, 1
    %vm205 = vcmp.gt.s32.totalorder %v204, 0
    %v206 = vsel %vm205, %v204, 0
    %v207 = vshrl.u32 %v206, 5
    %v208 = vand.u32 %v206, 31
    %v209 = vsub.s32 32, %v208
    %v210 = vshrl.u32 683565275, %v209
    %v211 = vshll.u32 683565275, %v208
    %v212 = vshrl.u32 2475754826, %v209
    %v213 = vor.u32 %v211, %v212
    %v214 = vshll.u32 2475754826, %v208
    %v215 = vshrl.u32 2131351028, %v209
    %v216 = vor.u32 %v214, %v215
    %v217 = vshll.u32 2131351028, %v208
    %v218 = vshrl.u32 2102212464, %v209
    %v219 = vor.u32 %v217, %v218
    %v220 = vshll.u32 2102212464, %v208
    %v221 = vshrl.u32 920167782, %v209
    %v222 = vor.u32 %v220, %v221
    %v223 = vshll.u32 920167782, %v208
    %v224 = vshrl.u32 1326507024, %v209
    %v225 = vor.u32 %v223, %v224
    %vm226 = vcmp.lt.s32.totalorder %v207, 1
    %vm227 = vcmp.lt.s32.totalorder %v207, 2
    %vm228 = vcmp.lt.s32.totalorder %v207, 3
    %vm229 = vcmp.lt.s32.totalorder %v207, 4
    %v230 = vsel %vm226, %v210, %v213
    %v231 = vsel %vm229, %v219, 2102212464
    %v232 = vsel %vm228, %v216, %v231
    %v233 = vsel %vm227, %v230, %v232
    %v234 = vsel %vm226, %v213, %v216
    %v235 = vsel %vm229, %v222, 920167782
    %v236 = vsel %vm228, %v219, %v235
    %v237 = vsel %vm227, %v234, %v236
    %v238 = vsel %vm226, %v216, %v219
    %v239 = vsel %vm229, %v225, 1326507024
    %v240 = vsel %vm228, %v222, %v239
    %v241 = vsel %vm227, %v238, %v240
    %v242 = vshll.u32 %v202, 8
    %v243 = vmul.u32.u64.compose %v242, %v241
    %v244 = vextract.low.u32 %v243
    %v245 = vextract.high.u32 %v243
    %v246 = vmul.u32.u64.compose %v242, %v237
    %v247 = vextract.low.u32 %v246
    %v248 = vextract.high.u32 %v246
    %v249 = vmul.u32 %v242, %v233
    %v250 = vadd.s32 %v245, %v247
    %vm251 = vc.u32 %v245, %v247
    %v252 = vadd.s32 %v248, 1
    %v253 = vsel %vm251, %v252, %v248
    %v254 = vadd.s32 %v249, %v253
    %v255 = vadd.s32 %v254, 536870912
    %v256 = vshrl.u32 %v255, 30
    %v257 = vshll.u32 %v256, 30
    %v258 = vsub.s32 %v254, %v257
    %vm259 = vcmp.lt.s32.totalorder %v258, 0
    %v260 = vsub.s32 0, %v258
    %v261 = vsel %vm259, %v260, %v258
    %v262 = vclz %v261
    %v263 = vsub.s32 %v262, 2
    %vm264 = vcmp.gt.s32.totalorder 0, %v263
    %v265 = vsel %vm264, 0, %v263
    %v266 = vsub.s32 32, %v265
    %v267 = vshll.u32 %v258, %v265
    %v268 = vshrl.u32 %v250, %v266
    %v269 = vor.u32 %v267, %v268
    %v270 = vsub.s32 4294967266, %v265
    %v271 = vadd.s32 %v270, 127
    %v272 = vshll.u32 %v271, 23
    %v273 = vor.u32 4788187, %v272
    %v274 = vand.u32 2147483647, %v273
    %v276 = vcvt.s32.f32 %v269
    %v277 = vmul.f32 %v276, %v274
    %v278 = vxor.u32 %v277, 2147483648
    %v279 = vsel %vm196, %v278, %v277
    %v280 = vsub.s32 4, %v256
    %v281 = vsel %vm196, %v280, %v256
    %v282 = vsel %vm195, %v86, %v279
    %v283 = vsel %vm195, 0, %v281
    %v284 = vcosq.f32.pop %v282
    %v285 = vsinq.f32.pop %v282
    %vm286 = vweird.f32 %v86
    %v287 = vand.u32 %v283, 3
    %vm288 = vcmp.lt.s32.totalorder %v287, 2
    %vm289 = vcmp.eq.s32.totalorder %v287, 0
    %v290 = vxor.u32 %v285, 2147483648
    %v291 = vsel %vm289, %v284, %v290
    %vm292 = vcmp.eq.s32.totalorder %v287, 2
    %v293 = vxor.u32 %v284, 2147483648
    %v294 = vsel %vm292, %v293, %v285
    %v295 = vsel %vm288, %v291, %v294
    %v296 = vsel %vm286, nan, %v295
    %v297 = vpack.c.bf16 %v296, %v296
    %v298 = vld [vmem:[%s3] sm:$0xf]
    %v299 = vld [vmem:[%s3 + $0x4] sm:$0xf]
    %v302 = vunpack.c.l.b16 %v298
    %v303 = vunpack.c.l.b16 %v299
    %v304 = vpack.c.b16 %v303, %v302
    %vm306 = vcmask 130048
    %v308 = vsel %vm306, %v297, 0
    %310 = vmatprep.subr.bf16.mxu0 0
    %311 = vmatpush1.bf16.msra.mxu0 %v304
    %312 = vmatprep.subr.bf16.mxu0 0
    %313 = vmatpush1.bf16.msra.mxu0 0
    %314 = vmatprep.subr.bf16.mxu0 0
    %315 = vmatpush1.bf16.msra.mxu0 0
    %316 = vmatprep.subr.bf16.mxu0 0
    %317 = vmatpush1.bf16.msra.mxu0 0
    %318 = vmatprep.subr.bf16.mxu0 0
    %319 = vmatpush1.bf16.msra.mxu0 0
    %320 = vmatprep.subr.bf16.mxu0 0
    %321 = vmatpush1.bf16.msra.mxu0 0
    %322 = vmatprep.subr.bf16.mxu0 0
    %323 = vmatpush1.bf16.msra.mxu0 0
    %324 = vmatprep.subr.bf16.mxu0 0
    %325 = vmatpush1.bf16.msra.mxu0 0
    %326 = vmatprep.subr.bf16.mxu0 0
    %327 = vmatpush1.bf16.msra.mxu0 0
    %328 = vmatprep.subr.bf16.mxu0 0
    %329 = vmatpush1.bf16.msra.mxu0 0
    %330 = vmatprep.subr.bf16.mxu0 0
    %331 = vmatpush1.bf16.msra.mxu0 0
    %332 = vmatprep.subr.bf16.mxu0 0
    %333 = vmatpush1.bf16.msra.mxu0 0
    %334 = vmatprep.subr.bf16.mxu0 0
    %335 = vmatpush1.bf16.msra.mxu0 0
    %336 = vmatprep.subr.bf16.mxu0 0
    %337 = vmatpush1.bf16.msra.mxu0 0
    %338 = vmatprep.subr.bf16.mxu0 0
    %339 = vmatpush1.bf16.msra.mxu0 0
    %340 = vmatprep.subr.bf16.mxu0 0
    %341 = vmatpush1.bf16.msra.mxu0 0
    %342 = vmatprep.mubr.bf16.mxu0 0
    %343 = vmatmul.mubr.bf16.gmra.mrb[0].mxu0 %v308
    %v344 = vpop.f32.mrb[0].mxu0
    %v345 = vadd.f32 0.0, %v344
    %v346 = vpop.f32.mrb[0].mxu0
    %v347 = vpop.f32.mrb[0].mxu0
    %v348 = vpop.f32.mrb[0].mxu0
    %349 = vdwg.mxu0
    %v352 = vunpack.c.l.b16 %v192
    %v353 = vunpack.c.l.b16 %v193
    %v354 = vpack.c.b16 %v353, %v352
    %v357 = vsel %vm306, %v191, 0
    %359 = vmatprep.subr.bf16.mxu0 0
    %360 = vmatpush1.bf16.msra.mxu0 %v354
    %361 = vmatprep.subr.bf16.mxu0 0
    %362 = vmatpush1.bf16.msra.mxu0 0
    %363 = vmatprep.subr.bf16.mxu0 0
    %364 = vmatpush1.bf16.msra.mxu0 0
    %365 = vmatprep.subr.bf16.mxu0 0
    %366 = vmatpush1.bf16.msra.mxu0 0
    %367 = vmatprep.subr.bf16.mxu0 0
    %368 = vmatpush1.bf16.msra.mxu0 0
    %369 = vmatprep.subr.bf16.mxu0 0
    %370 = vmatpush1.bf16.msra.mxu0 0
    %371 = vmatprep.subr.bf16.mxu0 0
    %372 = vmatpush1.bf16.msra.mxu0 0
    %373 = vmatprep.subr.bf16.mxu0 0
    %374 = vmatpush1.bf16.msra.mxu0 0
    %375 = vmatprep.subr.bf16.mxu0 0
    %376 = vmatpush1.bf16.msra.mxu0 0
    %377 = vmatprep.subr.bf16.mxu0 0
    %378 = vmatpush1.bf16.msra.mxu0 0
    %379 = vmatprep.subr.bf16.mxu0 0
    %380 = vmatpush1.bf16.msra.mxu0 0
    %381 = vmatprep.subr.bf16.mxu0 0
    %382 = vmatpush1.bf16.msra.mxu0 0
    %383 = vmatprep.subr.bf16.mxu0 0
    %384 = vmatpush1.bf16.msra.mxu0 0
    %385 = vmatprep.subr.bf16.mxu0 0
    %386 = vmatpush1.bf16.msra.mxu0 0
    %387 = vmatprep.subr.bf16.mxu0 0
    %388 = vmatpush1.bf16.msra.mxu0 0
    %389 = vmatprep.subr.bf16.mxu0 0
    %390 = vmatpush1.bf16.msra.mxu0 0
    %391 = vmatprep.mubr.bf16.mxu0 0
    %392 = vmatmul.mubr.bf16.gmra.mrb[0].mxu0 %v357
    %v393 = vpop.f32.mrb[0].mxu0
    %v394 = vadd.f32 %v345, %v393
    %v395 = vpop.f32.mrb[0].mxu0
    %v396 = vpop.f32.mrb[0].mxu0
    %v397 = vpop.f32.mrb[0].mxu0
    %398 = vdwg.mxu0
    %v399 = vld [vmem:[%s4] sm:$0x1]
    %v401 = vlaneseq
    %v402 = vshrl.u32 %v401, 7
    %v403 = vsub.s32 0, %v402
    %v404 = vrot.slane %v399, %v403
    %v406 = vadd.f32 %v394, %v404
    %v407 = vxor.u32 %v406, 2147483648
    %v408 = vmul.f32 %v407, 1.442695
    %v409 = vpow.pop %v408
    %v410 = vadd.f32 %v409, 1.0
    %v411 = vrcp.pop %v410
    %v412 = vmul.f32 1.0, %v411
    %v413 = vmul.f32 %v406, %v412
    %v414 = vpack.c.bf16 %v413, %v413
    %v415 = vld [vmem:[#allocation5] sm:$0xf]
    %v416 = vld [vmem:[#allocation5 + $0x4] sm:$0xf]
    %v417 = vld [vmem:[#allocation5 + $0x8] sm:$0xf]
    %v418 = vld [vmem:[#allocation5 + $0xc] sm:$0xf]
    %v419 = vld [vmem:[#allocation5 + $0x10] sm:$0xf]
    %v420 = vld [vmem:[#allocation5 + $0x14] sm:$0xf]
    %v421 = vld [vmem:[#allocation5 + $0x18] sm:$0xf]
    %v422 = vld [vmem:[#allocation5 + $0x1c] sm:$0xf]
    %v423 = vld [vmem:[#allocation5 + $0x20] sm:$0xf]
    %v424 = vld [vmem:[#allocation5 + $0x24] sm:$0xf]
    %v425 = vld [vmem:[#allocation5 + $0x28] sm:$0xf]
    %v426 = vld [vmem:[#allocation5 + $0x2c] sm:$0xf]
    %v427 = vld [vmem:[#allocation5 + $0x30] sm:$0xf]
    %v428 = vld [vmem:[#allocation5 + $0x34] sm:$0xf]
    %v429 = vld [vmem:[#allocation5 + $0x38] sm:$0xf]
    %v430 = vld [vmem:[#allocation5 + $0x3c] sm:$0xf]
    %v431 = vld [vmem:[%s6] sm:$0x1]
    %v433 = vlaneseq
    %v434 = vshrl.u32 %v433, 7
    %v435 = vsub.s32 0, %v434
    %v436 = vrot.slane %v431, %v435
    %v454 = vunpack.c.l.b16 %v415
    %v455 = vunpack.c.l.b16 %v416
    %v456 = vunpack.c.l.b16 %v417
    %v457 = vunpack.c.l.b16 %v418
    %v458 = vunpack.c.l.b16 %v419
    %v459 = vunpack.c.l.b16 %v420
    %v460 = vunpack.c.l.b16 %v421
    %v461 = vunpack.c.l.b16 %v422
    %v462 = vunpack.c.l.b16 %v423
    %v463 = vunpack.c.l.b16 %v424
    %v464 = vunpack.c.l.b16 %v425
    %v465 = vunpack.c.l.b16 %v426
    %v466 = vunpack.c.l.b16 %v427
    %v467 = vunpack.c.l.b16 %v428
    %v468 = vunpack.c.l.b16 %v429
    %v469 = vunpack.c.l.b16 %v430
    %v470 = vpack.c.b16 %v455, %v454
    %v471 = vpack.c.b16 %v457, %v456
    %v472 = vpack.c.b16 %v459, %v458
    %v473 = vpack.c.b16 %v461, %v460
    %v474 = vpack.c.b16 %v463, %v462
    %v475 = vpack.c.b16 %v465, %v464
    %v476 = vpack.c.b16 %v467, %v466
    %v477 = vpack.c.b16 %v469, %v468
    %486 = vmatprep.subr.bf16.mxu0 0
    %487 = vmatpush1.bf16.msra.mxu0 %v470
    %488 = vmatprep.subr.bf16.mxu0 0
    %489 = vmatpush1.bf16.msra.mxu0 %v471
    %490 = vmatprep.subr.bf16.mxu0 0
    %491 = vmatpush1.bf16.msra.mxu0 %v472
    %492 = vmatprep.subr.bf16.mxu0 0
    %493 = vmatpush1.bf16.msra.mxu0 %v473
    %494 = vmatprep.subr.bf16.mxu0 0
    %495 = vmatpush1.bf16.msra.mxu0 %v474
    %496 = vmatprep.subr.bf16.mxu0 0
    %497 = vmatpush1.bf16.msra.mxu0 %v475
    %498 = vmatprep.subr.bf16.mxu0 0
    %499 = vmatpush1.bf16.msra.mxu0 %v476
    %500 = vmatprep.subr.bf16.mxu0 0
    %501 = vmatpush1.bf16.msra.mxu0 %v477
    %502 = vmatprep.subr.bf16.mxu0 0
    %503 = vmatpush1.bf16.msra.mxu0 0
    %504 = vmatprep.subr.bf16.mxu0 0
    %505 = vmatpush1.bf16.msra.mxu0 0
    %506 = vmatprep.subr.bf16.mxu0 0
    %507 = vmatpush1.bf16.msra.mxu0 0
    %508 = vmatprep.subr.bf16.mxu0 0
    %509 = vmatpush1.bf16.msra.mxu0 0
    %510 = vmatprep.subr.bf16.mxu0 0
    %511 = vmatpush1.bf16.msra.mxu0 0
    %512 = vmatprep.subr.bf16.mxu0 0
    %513 = vmatpush1.bf16.msra.mxu0 0
    %514 = vmatprep.subr.bf16.mxu0 0
    %515 = vmatpush1.bf16.msra.mxu0 0
    %516 = vmatprep.subr.bf16.mxu0 0
    %517 = vmatpush1.bf16.msra.mxu0 0
    %518 = vmatprep.mubr.bf16.mxu0 0
    %519 = vmatmul.mubr.bf16.gmra.mrb[0].mxu0 %v414
    %v520 = vpop.f32.mrb[0].mxu0
    %v521 = vadd.f32 %v436, %v520
    %v522 = vpop.f32.mrb[0].mxu0
    %v523 = vpop.f32.mrb[0].mxu0
    %v524 = vpop.f32.mrb[0].mxu0
    %525 = vdwg.mxu0
    %v526 = vxor.u32 %v521, 2147483648
    %v527 = vmul.f32 %v526, 1.442695
    %v528 = vpow.pop %v527
    %v529 = vadd.f32 %v528, 1.0
    %v530 = vrcp.pop %v529
    %v531 = vmul.f32 1.0, %v530
    %v532 = vmul.f32 %v521, %v531
    %v533 = vpack.c.bf16 %v532, %v532
    %v534 = vld [vmem:[#allocation7] sm:$0xf]
    %v535 = vld [vmem:[#allocation7 + $0x4] sm:$0xf]
    %v536 = vld [vmem:[#allocation7 + $0x8] sm:$0xf]
    %v537 = vld [vmem:[#allocation7 + $0xc] sm:$0xf]
    %v538 = vld [vmem:[#allocation7 + $0x10] sm:$0xf]
    %v539 = vld [vmem:[#allocation7 + $0x14] sm:$0xf]
    %v540 = vld [vmem:[#allocation7 + $0x18] sm:$0xf]
    %v541 = vld [vmem:[#allocation7 + $0x1c] sm:$0xf]
    %v542 = vld [vmem:[#allocation7 + $0x20] sm:$0xf]
    %v543 = vld [vmem:[#allocation7 + $0x24] sm:$0xf]
    %v544 = vld [vmem:[#allocation7 + $0x28] sm:$0xf]
    %v545 = vld [vmem:[#allocation7 + $0x2c] sm:$0xf]
    %v546 = vld [vmem:[#allocation7 + $0x30] sm:$0xf]
    %v547 = vld [vmem:[#allocation7 + $0x34] sm:$0xf]
    %v548 = vld [vmem:[#allocation7 + $0x38] sm:$0xf]
    %v549 = vld [vmem:[#allocation7 + $0x3c] sm:$0xf]
    %v550 = vld [vmem:[%s8] sm:$0x1]
    %v552 = vlaneseq
    %v553 = vshrl.u32 %v552, 7
    %v554 = vsub.s32 0, %v553
    %v555 = vrot.slane %v550, %v554
    %v573 = vunpack.c.l.b16 %v534
    %v574 = vunpack.c.l.b16 %v535
    %v575 = vunpack.c.l.b16 %v536
    %v576 = vunpack.c.l.b16 %v537
    %v577 = vunpack.c.l.b16 %v538
    %v578 = vunpack.c.l.b16 %v539
    %v579 = vunpack.c.l.b16 %v540
    %v580 = vunpack.c.l.b16 %v541
    %v581 = vunpack.c.l.b16 %v542
    %v582 = vunpack.c.l.b16 %v543
    %v583 = vunpack.c.l.b16 %v544
    %v584 = vunpack.c.l.b16 %v545
    %v585 = vunpack.c.l.b16 %v546
    %v586 = vunpack.c.l.b16 %v547
    %v587 = vunpack.c.l.b16 %v548
    %v588 = vunpack.c.l.b16 %v549
    %v589 = vpack.c.b16 %v574, %v573
    %v590 = vpack.c.b16 %v576, %v575
    %v591 = vpack.c.b16 %v578, %v577
    %v592 = vpack.c.b16 %v580, %v579
    %v593 = vpack.c.b16 %v582, %v581
    %v594 = vpack.c.b16 %v584, %v583
    %v595 = vpack.c.b16 %v586, %v585
    %v596 = vpack.c.b16 %v588, %v587
    %605 = vmatprep.subr.bf16.mxu0 0
    %606 = vmatpush1.bf16.msra.mxu0 %v589
    %607 = vmatprep.subr.bf16.mxu0 0
    %608 = vmatpush1.bf16.msra.mxu0 %v590
    %609 = vmatprep.subr.bf16.mxu0 0
    %610 = vmatpush1.bf16.msra.mxu0 %v591
    %611 = vmatprep.subr.bf16.mxu0 0
    %612 = vmatpush1.bf16.msra.mxu0 %v592
    %613 = vmatprep.subr.bf16.mxu0 0
    %614 = vmatpush1.bf16.msra.mxu0 %v593
    %615 = vmatprep.subr.bf16.mxu0 0
    %616 = vmatpush1.bf16.msra.mxu0 %v594
    %617 = vmatprep.subr.bf16.mxu0 0
    %618 = vmatpush1.bf16.msra.mxu0 %v595
    %619 = vmatprep.subr.bf16.mxu0 0
    %620 = vmatpush1.bf16.msra.mxu0 %v596
    %621 = vmatprep.subr.bf16.mxu0 0
    %622 = vmatpush1.bf16.msra.mxu0 0
    %623 = vmatprep.subr.bf16.mxu0 0
    %624 = vmatpush1.bf16.msra.mxu0 0
    %625 = vmatprep.subr.bf16.mxu0 0
    %626 = vmatpush1.bf16.msra.mxu0 0
    %627 = vmatprep.subr.bf16.mxu0 0
    %628 = vmatpush1.bf16.msra.mxu0 0
    %629 = vmatprep.subr.bf16.mxu0 0
    %630 = vmatpush1.bf16.msra.mxu0 0
    %631 = vmatprep.subr.bf16.mxu0 0
    %632 = vmatpush1.bf16.msra.mxu0 0
    %633 = vmatprep.subr.bf16.mxu0 0
    %634 = vmatpush1.bf16.msra.mxu0 0
    %635 = vmatprep.subr.bf16.mxu0 0
    %636 = vmatpush1.bf16.msra.mxu0 0
    %637 = vmatprep.mubr.bf16.mxu0 0
    %638 = vmatmul.mubr.bf16.gmra.mrb[0].mxu0 %v533
    %v639 = vpop.f32.mrb[0].mxu0
    %v640 = vadd.f32 %v555, %v639
    %v641 = vpop.f32.mrb[0].mxu0
    %v642 = vpop.f32.mrb[0].mxu0
    %v643 = vpop.f32.mrb[0].mxu0
    %644 = vdwg.mxu0
    %645 = vst [vmem:[#allocation8] sm:$0xff] %v640
    // Predicated region
    $region50: #{tpu_custom_call.1} parent=1 // pred_check
      _
    $region51: #{tpu_custom_call.1} parent=1 // pred_check_branch
      %647 = sbr.rel (0) target = $region53
    $region52: #{tpu_custom_call.1} parent=1 // pred_region
      %s649 = ssub.s32 128, 128
      %650 = vsyncadd [#allocation4], %s649
      %s652 = sshll.u32 [#allocation8], 4
      %s653 = int_to_ptr.vmem [resolvable:$true] %s652
      %655 = dma.vmem_to_hbm [thread:$0]  %s653, 128, %s9, [#allocation4]
    $region53: #{tpu_custom_call.1} parent=1 // pred_fallthru
      _
    // Predicated region
    $region54: #{tpu_custom_call.1} parent=1 // pred_check
      _
    $region55: #{tpu_custom_call.1} parent=1 // pred_check_branch
      %657 = sbr.rel (0) target = $region57
    $region56: #{tpu_custom_call.1} parent=1 // pred_region
      %658 = dma.done [#allocation4], 128
    $region57: #{tpu_custom_call.1} parent=1 // pred_fallthru
      _
    %659 = vsyncpa [#allocation3], 1
    %660 = vsyncpa [#allocation6], 1
    %661 = vsyncpa [#allocation4], 1

</llo_original>
